<compile_context>
chip_gen: v6e
topology: v6e:2x2x1
jax: 0.10.0
libtpu: 0.0.40
codegen_flags: <defaults>
</compile_context>

<pallas_src>
import jax
import jax.numpy as jnp
from jax.experimental import pallas as pl
from jax.experimental.pallas import tpu as pltpu

HID = 128            # SubEquiMLP hidden_dim (FCBlock hidden width & output width)
LAYER_NUM = 3        # FCBlock hidden layer count -> 5 Linear layers total
N_LINEAR = LAYER_NUM + 2


def _round_up(x, m):
    return ((x + m - 1) // m) * m


# --------------------------- Pallas kernel ----------------------------------
# Fused FCBlock MLP: apply `num_sets` independent parameter sets to the SAME
# row block x[tr, Din_pad].  Matmuls in bf16 on the MXU, accumulate / bias /
# ReLU in f32.  The last Linear layer is pre-collapsed into a 128-vector
# (wv = W_last @ 1); the kernel emits sum_o(out[...,o]) - sum(b_last) per row.

def _make_fused_mlp_kernel(num_sets):
    def kernel(*refs):
        x_ref = refs[0]
        prm = refs[1:1 + 4 * num_sets]
        outs = refs[1 + 4 * num_sets:]
        xb = x_ref[...].astype(jnp.bfloat16)
        for s in range(num_sets):
            w1 = prm[4 * s]        # (Din_pad, HID)            bf16
            wh = prm[4 * s + 1]    # (N_LINEAR-2, HID, HID)    bf16
            bs = prm[4 * s + 2]    # (N_LINEAR-1, 1, HID)      f32
            wv = prm[4 * s + 3]    # (1, HID)                  f32 (collapsed last layer)
            h = jnp.dot(xb, w1[...], preferred_element_type=jnp.float32)
            h = jnp.maximum(h + bs[0], 0.0)
            for l in range(N_LINEAR - 2):              # hidden layers, all ReLU
                h = jnp.dot(h.astype(jnp.bfloat16), wh[l],
                            preferred_element_type=jnp.float32) + bs[l + 1]
                h = jnp.maximum(h, 0.0)
            # sum over the (activation-free) last layer's output channels:
            # sum_o(h @ W_last)[r,o] = h[r,:] . (W_last @ 1).  The summed bias
            # is added outside the kernel.
            outs[s][...] = jnp.sum(h * wv[...], axis=-1, keepdims=True)
    return kernel


def fused_mlp_scalar_pallas(param_sets, x, row_tile=512):
    """Per parameter set, compute sum_o FCBlock(x)[r, o] - sum(b_last).

    x[R, Din_pad] with Din_pad a multiple of 128 (callers build the feature
    tensor directly at padded width).  Returns a tuple of [R, 1] f32 arrays.
    """
    R, Dinp = x.shape
    assert Dinp % HID == 0
    num_sets = len(param_sets)

    r8 = _round_up(max(R, 8), 8)
    tr = min(row_tile, r8)           # big tiles, clamped for small problems
    Rp = _round_up(r8, tr)
    x = x.astype(jnp.float32)
    if Rp != R:
        # at most tr-1 zero rows; never a full duplicate copy of the activations
        x = jnp.pad(x, ((0, Rp - R), (0, 0)))

    operands = [x]
    in_specs = [pl.BlockSpec((tr, Dinp), lambda i: (i, 0))]
    for p in param_sets:
        din = p["w1"].shape[0]
        w1 = jnp.zeros((Dinp, HID), jnp.float32).at[:din, :].set(p["w1"])
        w1 = w1.astype(jnp.bfloat16)
        wh = jnp.stack([p[f"w{k}"] for k in range(2, N_LINEAR)]
                       ).astype(jnp.bfloat16)                       # (3,HID,HID)
        bs = jnp.stack([p[f"b{k}"] for k in range(1, N_LINEAR)]
                       ).reshape(N_LINEAR - 1, 1, HID).astype(jnp.float32)
        wv = jnp.sum(p[f"w{N_LINEAR}"], axis=1).reshape(1, HID).astype(jnp.float32)
        operands += [w1, wh, bs, wv]
        in_specs += [
            pl.BlockSpec((Dinp, HID), lambda i: (0, 0)),
            pl.BlockSpec((N_LINEAR - 2, HID, HID), lambda i: (0, 0, 0)),
            pl.BlockSpec((N_LINEAR - 1, 1, HID), lambda i: (0, 0, 0)),
            pl.BlockSpec((1, HID), lambda i: (0, 0)),
        ]

    out_shape = tuple(jax.ShapeDtypeStruct((Rp, 1), jnp.float32)
                      for _ in range(num_sets))
    out_specs = tuple(pl.BlockSpec((tr, 1), lambda i: (i, 0))
                      for _ in range(num_sets))

    outs = pl.pallas_call(
        _make_fused_mlp_kernel(num_sets),
        out_shape=out_shape,
        grid=(Rp // tr,),
        in_specs=in_specs,
        out_specs=out_specs,
        compiler_params=pltpu.CompilerParams(
            dimension_semantics=("parallel",)),
    )(*operands)
    if not isinstance(outs, (tuple, list)):
        outs = (outs,)
    return tuple(o[:R] for o in outs)


# --------------------------- model glue (plain JAX) -------------------------

def expat(t, dim, n):
    return jnp.repeat(jnp.expand_dims(t, dim), n, axis=dim)


def inv_product(z1, z2):
    d = z1.shape[-1] // 2
    return jnp.concatenate([z1 - z2, z1[..., d:], z2[..., d:]], axis=-1)


def mask_avg(values, masks):
    # Tiny [B,M,N] @ [B,N,D] matmuls -> XLA (Pallas padding/launch overhead
    # would dominate).  NB: matches PyTorch exactly; an all-zero mask column
    # would divide by zero, as in the original.
    masks_t = jnp.swapaxes(masks, 1, 2)
    return jnp.matmul(masks_t, values) / jnp.sum(masks_t, axis=-1, keepdims=True)


def _diag_feats(z, h, g):
    """Diagonal rows of SubEquiMLP's pairwise MLP input, at 128-aligned width.

    gram[b,n,n] = <[z_n, g], [z_n, g]> = ||z_n||^2 + ||g||^2, and the row-
    broadcast h on the diagonal is simply h[b,n].  Zero padding is appended in
    the same concat (no separate pad pass); w1's K dim is padded to match.
    """
    B, Np, _ = z.shape
    din = 1 + h.shape[-1]
    dinp = _round_up(din, HID)
    gram_diag = jnp.sum(z * z, axis=-1, keepdims=True) + jnp.sum(g * g)
    parts = [gram_diag, h]
    if dinp > din:
        parts.append(jnp.zeros((B, Np, dinp - din), h.dtype))
    return jnp.concatenate(parts, axis=-1).reshape(B * Np, dinp)


def sub_equi_mlp_factored(param_sets, z, h, g):
    """SubEquiMLP.forward(z, h) for >=1 parameter sets sharing (z, h), factored.

    Uses the identity  einsum('bnno,bmd->bnd', mat, z)
                     = (sum_o mat[b,n,n,o]) * (sum_m z[b,m,d]),
    so only the Np diagonal rows of the pairwise MLP are evaluated (exactly
    the values the original PyTorch einsum consumes).  Returns
    (list of scalar fields s[B,Np], zsum[B,Dz]) with full output
    out[b,n,:] = s[b,n] * zsum[b,:].
    """
    B, Np, _ = z.shape
    feats = _diag_feats(z, h, g)                          # [B*Np, Din_pad]
    raw = fused_mlp_scalar_pallas(param_sets, feats)      # tuple of [B*Np, 1]
    zsum = jnp.sum(z, axis=1)                             # [B, Dz]
    s_list = []
    for p, r in zip(param_sets, raw):
        b_last_sum = jnp.sum(p[f"b{N_LINEAR}"])           # re-add collapsed bias sum
        s_list.append(r.reshape(B, Np) + b_last_sum)      # [B, Np]
    return s_list, zsum


def subgnn_forward(params, z, h, edges, masks):
    B, N, D2 = z.shape
    g = params["g"]

    masked_z = mask_avg(z, masks)                    # [B,M,D2]
    masked_h = mask_avg(h, masks)                    # [B,M,H]
    cent_z = jnp.matmul(masks, masked_z)             # [B,N,D2]
    cent_h = jnp.matmul(masks, masked_h)             # [B,N,H]

    cat_z = jnp.concatenate([
        inv_product(expat(z, 2, N), expat(cent_z, 2, N)),
        inv_product(expat(z, 1, N), expat(cent_z, 1, N)),
        inv_product(expat(z, 1, N), expat(z, 2, N)),
    ], axis=-1).reshape(B, N * N, -1)                # [B, N*N, 6*D2]

    cat_h = jnp.concatenate([
        expat(h, 1, N), expat(h, 2, N),
        expat(cent_h, 1, N), expat(cent_h, 2, N),
    ], axis=-1).reshape(B, N * N, -1)                # [B, N*N, 4*H]

    # encode1 / encode2 share identical inputs -> one fused Pallas call.
    (s1, s2), zsum_cat = sub_equi_mlp_factored(
        [params["encode1"], params["encode2"]], cat_z, cat_h, g)

    # encodeX.reshape(B,N,N,-1).sum(2) == (sum_j sX[b,i,j]) * zsum_cat[b,:]
    # -> never materialize the [B, N*N, 6*D2] encode tensors.
    enc1_sum = s1.reshape(B, N, N).sum(axis=2)[..., None] * zsum_cat[:, None, :]
    enc2_sum = s2.reshape(B, N, N).sum(axis=2)[..., None] * zsum_cat[:, None, :]

    covar = jnp.concatenate([enc1_sum, inv_product(z, cent_z)], axis=-1)
    invar = jnp.concatenate([enc2_sum, h, cent_h], axis=-1)

    # NB: in the PyTorch __init__, self.decode1 is assigned twice and decode2
    # reuses the same module; only decode1 is returned.
    (sd,), zsum_cov = sub_equi_mlp_factored([params["decode1"]], covar, invar, g)
    dec1 = sd[..., None] * zsum_cov[:, None, :]
    return dec1


# --------------------------- parameter init ---------------------------------

def init_fcblock(key, in_dim):
    dims = [(in_dim, HID)] + [(HID, HID)] * (LAYER_NUM + 1)   # 5 Linear layers
    params = {}
    for idx, (di, do) in enumerate(dims, start=1):
        key, k1 = jax.random.split(key)
        params[f"w{idx}"] = (jax.random.normal(k1, (di, do), jnp.float32)
                             / jnp.sqrt(jnp.float32(di)))
        params[f"b{idx}"] = jnp.zeros((do,), jnp.float32)
    return params


if __name__ == "__main__":
    key = jax.random.PRNGKey(0)
    x_dim, h_dim = 2, 32
    B, N, M = 2, 4, 3
    D2, H = 2 * x_dim, h_dim

    k1, k2, k3, kp = jax.random.split(key, 4)
    z = jax.random.normal(k1, (B, N, D2), jnp.float32)
    h = jax.random.normal(k2, (B, N, H), jnp.float32)
    masks = jax.random.uniform(k3, (B, N, M), jnp.float32, minval=0.1, maxval=1.0)
    edges = jnp.ones((B, N, N), jnp.float32)   # only used for isinstance check upstream

    kp1, kp2, kp3 = jax.random.split(kp, 3)
    params = {
        "g": jnp.array([0.0, 0.0, -1.0], jnp.float32),
        "encode1": init_fcblock(kp1, 4 * h_dim + 1),
        "encode2": init_fcblock(kp2, 4 * h_dim + 1),
        "decode1": init_fcblock(kp3, 1 + 12 * x_dim + 2 * h_dim),
    }

    out = jax.jit(subgnn_forward)(params, z, h, edges, masks)
    out = jax.block_until_ready(out)
    assert out.shape == (B, N, 16 * x_dim), out.shape     # covar dim = 8*D2
    assert bool(jnp.all(jnp.isfinite(out)))
    print("KERNEL_OK")
</pallas_src>

<mosaic_0001>
module attributes {stable_mosaic.version = 11 : i64} {
  func.func @kernel(%arg0: i32, %arg1: memref<32x256xf32, #tpu.memory_space<vmem>>, %arg2: memref<256x128xbf16, #tpu.memory_space<vmem>>, %arg3: memref<3x128x128xbf16, #tpu.memory_space<vmem>>, %arg4: memref<4x1x128xf32, #tpu.memory_space<vmem>>, %arg5: memref<1x128xf32, #tpu.memory_space<vmem>>, %arg6: memref<256x128xbf16, #tpu.memory_space<vmem>>, %arg7: memref<3x128x128xbf16, #tpu.memory_space<vmem>>, %arg8: memref<4x1x128xf32, #tpu.memory_space<vmem>>, %arg9: memref<1x128xf32, #tpu.memory_space<vmem>>, %arg10: memref<32x1xf32, #tpu.memory_space<vmem>>, %arg11: memref<32x1xf32, #tpu.memory_space<vmem>>) attributes {dimension_semantics = [#tpu.dimension_semantics<parallel>], iteration_bounds = array<i64: 1>, scalar_prefetch = 0 : i64, scratch_operands = 0 : i64, tpu.core_type = #tpu.core_type<tc>, window_params = [{transform_indices = @transform_0, window_bounds = array<i64: 32, 256>}, {pipeline_mode = #tpu.pipeline_mode<synchronous>, transform_indices = @transform_1, window_bounds = array<i64: 256, 128>}, {pipeline_mode = #tpu.pipeline_mode<synchronous>, transform_indices = @transform_2, window_bounds = array<i64: 3, 128, 128>}, {pipeline_mode = #tpu.pipeline_mode<synchronous>, transform_indices = @transform_3, window_bounds = array<i64: 4, 1, 128>}, {pipeline_mode = #tpu.pipeline_mode<synchronous>, transform_indices = @transform_4, window_bounds = array<i64: 1, 128>}, {pipeline_mode = #tpu.pipeline_mode<synchronous>, transform_indices = @transform_5, window_bounds = array<i64: 256, 128>}, {pipeline_mode = #tpu.pipeline_mode<synchronous>, transform_indices = @transform_6, window_bounds = array<i64: 3, 128, 128>}, {pipeline_mode = #tpu.pipeline_mode<synchronous>, transform_indices = @transform_7, window_bounds = array<i64: 4, 1, 128>}, {pipeline_mode = #tpu.pipeline_mode<synchronous>, transform_indices = @transform_8, window_bounds = array<i64: 1, 128>}, {transform_indices = @transform_9, window_bounds = array<i64: 32, 1>}, {transform_indices = @transform_10, window_bounds = array<i64: 32, 1>}]} {
    %c0 = arith.constant 0 : index
    %c0_0 = arith.constant 0 : index
    %0 = vector.load %arg1[%c0, %c0_0] : memref<32x256xf32, #tpu.memory_space<vmem>>, vector<32x256xf32>
    %1 = arith.truncf %0 : vector<32x256xf32> to vector<32x256xbf16>
    %c0_1 = arith.constant 0 : index
    %c0_2 = arith.constant 0 : index
    %2 = vector.load %arg2[%c0_1, %c0_2] : memref<256x128xbf16, #tpu.memory_space<vmem>>, vector<256x128xbf16>
    %cst = arith.constant dense<0.000000e+00> : vector<32x128xf32>
    %3 = tpu.matmul %1, %2, %cst {dimension_numbers = #tpu.dot_dimension_numbers<[1], [0], [0], [1], [0, 0, 1, 1], [], []>} : vector<32x256xbf16>, vector<256x128xbf16>, vector<32x128xf32> -> vector<32x128xf32>
    %c0_3 = arith.constant 0 : index
    %c0_4 = arith.constant 0 : index
    %c0_5 = arith.constant 0 : index
    %4 = vector.load %arg4[%c0_3, %c0_4, %c0_5] : memref<4x1x128xf32, #tpu.memory_space<vmem>>, vector<1x1x128xf32>
    %5 = vector.shape_cast %4 : vector<1x1x128xf32> to vector<1x128xf32>
    %6 = vector.broadcast %5 : vector<1x128xf32> to vector<32x128xf32>
    %7 = arith.addf %3, %6 : vector<32x128xf32>
    %cst_6 = arith.constant 0.000000e+00 : f32
    %8 = vector.broadcast %cst_6 : f32 to vector<32x128xf32>
    %9 = arith.maximumf %7, %8 : vector<32x128xf32>
    %10 = arith.truncf %9 : vector<32x128xf32> to vector<32x128xbf16>
    %c0_7 = arith.constant 0 : index
    %c0_8 = arith.constant 0 : index
    %c0_9 = arith.constant 0 : index
    %11 = vector.load %arg3[%c0_7, %c0_8, %c0_9] : memref<3x128x128xbf16, #tpu.memory_space<vmem>>, vector<1x128x128xbf16>
    %12 = vector.shape_cast %11 : vector<1x128x128xbf16> to vector<128x128xbf16>
    %cst_10 = arith.constant dense<0.000000e+00> : vector<32x128xf32>
    %13 = tpu.matmul %10, %12, %cst_10 {dimension_numbers = #tpu.dot_dimension_numbers<[1], [0], [0], [1], [0, 0, 1, 1], [], []>} : vector<32x128xbf16>, vector<128x128xbf16>, vector<32x128xf32> -> vector<32x128xf32>
    %c1 = arith.constant 1 : index
    %c0_11 = arith.constant 0 : index
    %c0_12 = arith.constant 0 : index
    %14 = vector.load %arg4[%c1, %c0_11, %c0_12] : memref<4x1x128xf32, #tpu.memory_space<vmem>>, vector<1x1x128xf32>
    %15 = vector.shape_cast %14 : vector<1x1x128xf32> to vector<1x128xf32>
    %16 = vector.broadcast %15 : vector<1x128xf32> to vector<32x128xf32>
    %17 = arith.addf %13, %16 : vector<32x128xf32>
    %cst_13 = arith.constant 0.000000e+00 : f32
    %18 = vector.broadcast %cst_13 : f32 to vector<32x128xf32>
    %19 = arith.maximumf %17, %18 : vector<32x128xf32>
    %20 = arith.truncf %19 : vector<32x128xf32> to vector<32x128xbf16>
    %c1_14 = arith.constant 1 : index
    %c0_15 = arith.constant 0 : index
    %c0_16 = arith.constant 0 : index
    %21 = vector.load %arg3[%c1_14, %c0_15, %c0_16] : memref<3x128x128xbf16, #tpu.memory_space<vmem>>, vector<1x128x128xbf16>
    %22 = vector.shape_cast %21 : vector<1x128x128xbf16> to vector<128x128xbf16>
    %cst_17 = arith.constant dense<0.000000e+00> : vector<32x128xf32>
    %23 = tpu.matmul %20, %22, %cst_17 {dimension_numbers = #tpu.dot_dimension_numbers<[1], [0], [0], [1], [0, 0, 1, 1], [], []>} : vector<32x128xbf16>, vector<128x128xbf16>, vector<32x128xf32> -> vector<32x128xf32>
    %c2 = arith.constant 2 : index
    %c0_18 = arith.constant 0 : index
    %c0_19 = arith.constant 0 : index
    %24 = vector.load %arg4[%c2, %c0_18, %c0_19] : memref<4x1x128xf32, #tpu.memory_space<vmem>>, vector<1x1x128xf32>
    %25 = vector.shape_cast %24 : vector<1x1x128xf32> to vector<1x128xf32>
    %26 = vector.broadcast %25 : vector<1x128xf32> to vector<32x128xf32>
    %27 = arith.addf %23, %26 : vector<32x128xf32>
    %cst_20 = arith.constant 0.000000e+00 : f32
    %28 = vector.broadcast %cst_20 : f32 to vector<32x128xf32>
    %29 = arith.maximumf %27, %28 : vector<32x128xf32>
    %30 = arith.truncf %29 : vector<32x128xf32> to vector<32x128xbf16>
    %c2_21 = arith.constant 2 : index
    %c0_22 = arith.constant 0 : index
    %c0_23 = arith.constant 0 : index
    %31 = vector.load %arg3[%c2_21, %c0_22, %c0_23] : memref<3x128x128xbf16, #tpu.memory_space<vmem>>, vector<1x128x128xbf16>
    %32 = vector.shape_cast %31 : vector<1x128x128xbf16> to vector<128x128xbf16>
    %cst_24 = arith.constant dense<0.000000e+00> : vector<32x128xf32>
    %33 = tpu.matmul %30, %32, %cst_24 {dimension_numbers = #tpu.dot_dimension_numbers<[1], [0], [0], [1], [0, 0, 1, 1], [], []>} : vector<32x128xbf16>, vector<128x128xbf16>, vector<32x128xf32> -> vector<32x128xf32>
    %c3 = arith.constant 3 : index
    %c0_25 = arith.constant 0 : index
    %c0_26 = arith.constant 0 : index
    %34 = vector.load %arg4[%c3, %c0_25, %c0_26] : memref<4x1x128xf32, #tpu.memory_space<vmem>>, vector<1x1x128xf32>
    %35 = vector.shape_cast %34 : vector<1x1x128xf32> to vector<1x128xf32>
    %36 = vector.broadcast %35 : vector<1x128xf32> to vector<32x128xf32>
    %37 = arith.addf %33, %36 : vector<32x128xf32>
    %cst_27 = arith.constant 0.000000e+00 : f32
    %38 = vector.broadcast %cst_27 : f32 to vector<32x128xf32>
    %39 = arith.maximumf %37, %38 : vector<32x128xf32>
    %c0_28 = arith.constant 0 : index
    %c0_29 = arith.constant 0 : index
    %40 = vector.load %arg5[%c0_28, %c0_29] : memref<1x128xf32, #tpu.memory_space<vmem>>, vector<1x128xf32>
    %41 = vector.broadcast %40 : vector<1x128xf32> to vector<32x128xf32>
    %42 = arith.mulf %39, %41 : vector<32x128xf32>
    %cst_30 = arith.constant dense<0.000000e+00> : vector<32xf32>
    %43 = vector.multi_reduction <add>, %42, %cst_30 [1] : vector<32x128xf32> to vector<32xf32>
    %44 = vector.shape_cast %43 : vector<32xf32> to vector<32x1xf32>
    %c0_31 = arith.constant 0 : index
    %c0_32 = arith.constant 0 : index
    %45 = vector.load %arg10[%c0_31, %c0_32] : memref<32x1xf32, #tpu.memory_space<vmem>>, vector<32x1xf32>
    tpu.vector_store %arg10[%c0_31, %c0_32], %44 {strides = array<i32>} : memref<32x1xf32, #tpu.memory_space<vmem>>, vector<32x1xf32>,
    %c0_33 = arith.constant 0 : index
    %c0_34 = arith.constant 0 : index
    %46 = vector.load %arg6[%c0_33, %c0_34] : memref<256x128xbf16, #tpu.memory_space<vmem>>, vector<256x128xbf16>
    %cst_35 = arith.constant dense<0.000000e+00> : vector<32x128xf32>
    %47 = tpu.matmul %1, %46, %cst_35 {dimension_numbers = #tpu.dot_dimension_numbers<[1], [0], [0], [1], [0, 0, 1, 1], [], []>} : vector<32x256xbf16>, vector<256x128xbf16>, vector<32x128xf32> -> vector<32x128xf32>
    %c0_36 = arith.constant 0 : index
    %c0_37 = arith.constant 0 : index
    %c0_38 = arith.constant 0 : index
    %48 = vector.load %arg8[%c0_36, %c0_37, %c0_38] : memref<4x1x128xf32, #tpu.memory_space<vmem>>, vector<1x1x128xf32>
    %49 = vector.shape_cast %48 : vector<1x1x128xf32> to vector<1x128xf32>
    %50 = vector.broadcast %49 : vector<1x128xf32> to vector<32x128xf32>
    %51 = arith.addf %47, %50 : vector<32x128xf32>
    %cst_39 = arith.constant 0.000000e+00 : f32
    %52 = vector.broadcast %cst_39 : f32 to vector<32x128xf32>
    %53 = arith.maximumf %51, %52 : vector<32x128xf32>
    %54 = arith.truncf %53 : vector<32x128xf32> to vector<32x128xbf16>
    %c0_40 = arith.constant 0 : index
    %c0_41 = arith.constant 0 : index
    %c0_42 = arith.constant 0 : index
    %55 = vector.load %arg7[%c0_40, %c0_41, %c0_42] : memref<3x128x128xbf16, #tpu.memory_space<vmem>>, vector<1x128x128xbf16>
    %56 = vector.shape_cast %55 : vector<1x128x128xbf16> to vector<128x128xbf16>
    %cst_43 = arith.constant dense<0.000000e+00> : vector<32x128xf32>
    %57 = tpu.matmul %54, %56, %cst_43 {dimension_numbers = #tpu.dot_dimension_numbers<[1], [0], [0], [1], [0, 0, 1, 1], [], []>} : vector<32x128xbf16>, vector<128x128xbf16>, vector<32x128xf32> -> vector<32x128xf32>
    %c1_44 = arith.constant 1 : index
    %c0_45 = arith.constant 0 : index
    %c0_46 = arith.constant 0 : index
    %58 = vector.load %arg8[%c1_44, %c0_45, %c0_46] : memref<4x1x128xf32, #tpu.memory_space<vmem>>, vector<1x1x128xf32>
    %59 = vector.shape_cast %58 : vector<1x1x128xf32> to vector<1x128xf32>
    %60 = vector.broadcast %59 : vector<1x128xf32> to vector<32x128xf32>
    %61 = arith.addf %57, %60 : vector<32x128xf32>
    %cst_47 = arith.constant 0.000000e+00 : f32
    %62 = vector.broadcast %cst_47 : f32 to vector<32x128xf32>
    %63 = arith.maximumf %61, %62 : vector<32x128xf32>
    %64 = arith.truncf %63 : vector<32x128xf32> to vector<32x128xbf16>
    %c1_48 = arith.constant 1 : index
    %c0_49 = arith.constant 0 : index
    %c0_50 = arith.constant 0 : index
    %65 = vector.load %arg7[%c1_48, %c0_49, %c0_50] : memref<3x128x128xbf16, #tpu.memory_space<vmem>>, vector<1x128x128xbf16>
    %66 = vector.shape_cast %65 : vector<1x128x128xbf16> to vector<128x128xbf16>
    %cst_51 = arith.constant dense<0.000000e+00> : vector<32x128xf32>
    %67 = tpu.matmul %64, %66, %cst_51 {dimension_numbers = #tpu.dot_dimension_numbers<[1], [0], [0], [1], [0, 0, 1, 1], [], []>} : vector<32x128xbf16>, vector<128x128xbf16>, vector<32x128xf32> -> vector<32x128xf32>
    %c2_52 = arith.constant 2 : index
    %c0_53 = arith.constant 0 : index
    %c0_54 = arith.constant 0 : index
    %68 = vector.load %arg8[%c2_52, %c0_53, %c0_54] : memref<4x1x128xf32, #tpu.memory_space<vmem>>, vector<1x1x128xf32>
    %69 = vector.shape_cast %68 : vector<1x1x128xf32> to vector<1x128xf32>
    %70 = vector.broadcast %69 : vector<1x128xf32> to vector<32x128xf32>
    %71 = arith.addf %67, %70 : vector<32x128xf32>
    %cst_55 = arith.constant 0.000000e+00 : f32
    %72 = vector.broadcast %cst_55 : f32 to vector<32x128xf32>
    %73 = arith.maximumf %71, %72 : vector<32x128xf32>
    %74 = arith.truncf %73 : vector<32x128xf32> to vector<32x128xbf16>
    %c2_56 = arith.constant 2 : index
    %c0_57 = arith.constant 0 : index
    %c0_58 = arith.constant 0 : index
    %75 = vector.load %arg7[%c2_56, %c0_57, %c0_58] : memref<3x128x128xbf16, #tpu.memory_space<vmem>>, vector<1x128x128xbf16>
    %76 = vector.shape_cast %75 : vector<1x128x128xbf16> to vector<128x128xbf16>
    %cst_59 = arith.constant dense<0.000000e+00> : vector<32x128xf32>
    %77 = tpu.matmul %74, %76, %cst_59 {dimension_numbers = #tpu.dot_dimension_numbers<[1], [0], [0], [1], [0, 0, 1, 1], [], []>} : vector<32x128xbf16>, vector<128x128xbf16>, vector<32x128xf32> -> vector<32x128xf32>
    %c3_60 = arith.constant 3 : index
    %c0_61 = arith.constant 0 : index
    %c0_62 = arith.constant 0 : index
    %78 = vector.load %arg8[%c3_60, %c0_61, %c0_62] : memref<4x1x128xf32, #tpu.memory_space<vmem>>, vector<1x1x128xf32>
    %79 = vector.shape_cast %78 : vector<1x1x128xf32> to vector<1x128xf32>
    %80 = vector.broadcast %79 : vector<1x128xf32> to vector<32x128xf32>
    %81 = arith.addf %77, %80 : vector<32x128xf32>
    %cst_63 = arith.constant 0.000000e+00 : f32
    %82 = vector.broadcast %cst_63 : f32 to vector<32x128xf32>
    %83 = arith.maximumf %81, %82 : vector<32x128xf32>
    %c0_64 = arith.constant 0 : index
    %c0_65 = arith.constant 0 : index
    %84 = vector.load %arg9[%c0_64, %c0_65] : memref<1x128xf32, #tpu.memory_space<vmem>>, vector<1x128xf32>
    %85 = vector.broadcast %84 : vector<1x128xf32> to vector<32x128xf32>
    %86 = arith.mulf %83, %85 : vector<32x128xf32>
    %cst_66 = arith.constant dense<0.000000e+00> : vector<32xf32>
    %87 = vector.multi_reduction <add>, %86, %cst_66 [1] : vector<32x128xf32> to vector<32xf32>
    %88 = vector.shape_cast %87 : vector<32xf32> to vector<32x1xf32>
    %c0_67 = arith.constant 0 : index
    %c0_68 = arith.constant 0 : index
    %89 = vector.load %arg11[%c0_67, %c0_68] : memref<32x1xf32, #tpu.memory_space<vmem>>, vector<32x1xf32>
    tpu.vector_store %arg11[%c0_67, %c0_68], %88 {strides = array<i32>} : memref<32x1xf32, #tpu.memory_space<vmem>>, vector<32x1xf32>,
    return
  }
  func.func @transform_0(%arg0: i32) -> (i32, i32) {
    %c0_i32 = arith.constant 0 : i32
    %c0_i32_0 = arith.constant 0 : i32
    return %arg0, %c0_i32 : i32, i32
  }
  func.func @transform_1(%arg0: i32) -> (i32, i32) {
    %c0_i32 = arith.constant 0 : i32
    %c0_i32_0 = arith.constant 0 : i32
    %c0_i32_1 = arith.constant 0 : i32
    return %c0_i32, %c0_i32_0 : i32, i32
  }
  func.func @transform_2(%arg0: i32) -> (i32, i32, i32) {
    %c0_i32 = arith.constant 0 : i32
    %c0_i32_0 = arith.constant 0 : i32
    %c0_i32_1 = arith.constant 0 : i32
    %c0_i32_2 = arith.constant 0 : i32
    return %c0_i32, %c0_i32_0, %c0_i32_1 : i32, i32, i32
  }
  func.func @transform_3(%arg0: i32) -> (i32, i32, i32) {
    %c0_i32 = arith.constant 0 : i32
    %c0_i32_0 = arith.constant 0 : i32
    %c0_i32_1 = arith.constant 0 : i32
    %c0_i32_2 = arith.constant 0 : i32
    return %c0_i32, %c0_i32_0, %c0_i32_1 : i32, i32, i32
  }
  func.func @transform_4(%arg0: i32) -> (i32, i32) {
    %c0_i32 = arith.constant 0 : i32
    %c0_i32_0 = arith.constant 0 : i32
    %c0_i32_1 = arith.constant 0 : i32
    return %c0_i32, %c0_i32_0 : i32, i32
  }
  func.func @transform_5(%arg0: i32) -> (i32, i32) {
    %c0_i32 = arith.constant 0 : i32
    %c0_i32_0 = arith.constant 0 : i32
    %c0_i32_1 = arith.constant 0 : i32
    return %c0_i32, %c0_i32_0 : i32, i32
  }
  func.func @transform_6(%arg0: i32) -> (i32, i32, i32) {
    %c0_i32 = arith.constant 0 : i32
    %c0_i32_0 = arith.constant 0 : i32
    %c0_i32_1 = arith.constant 0 : i32
    %c0_i32_2 = arith.constant 0 : i32
    return %c0_i32, %c0_i32_0, %c0_i32_1 : i32, i32, i32
  }
  func.func @transform_7(%arg0: i32) -> (i32, i32, i32) {
    %c0_i32 = arith.constant 0 : i32
    %c0_i32_0 = arith.constant 0 : i32
    %c0_i32_1 = arith.constant 0 : i32
    %c0_i32_2 = arith.constant 0 : i32
    return %c0_i32, %c0_i32_0, %c0_i32_1 : i32, i32, i32
  }
  func.func @transform_8(%arg0: i32) -> (i32, i32) {
    %c0_i32 = arith.constant 0 : i32
    %c0_i32_0 = arith.constant 0 : i32
    %c0_i32_1 = arith.constant 0 : i32
    return %c0_i32, %c0_i32_0 : i32, i32
  }
  func.func @transform_9(%arg0: i32) -> (i32, i32) {
    %c0_i32 = arith.constant 0 : i32
    %c0_i32_0 = arith.constant 0 : i32
    return %arg0, %c0_i32 : i32, i32
  }
  func.func @transform_10(%arg0: i32) -> (i32, i32) {
    %c0_i32 = arith.constant 0 : i32
    %c0_i32_0 = arith.constant 0 : i32
    return %arg0, %c0_i32 : i32, i32
  }
}

module attributes {stable_mosaic.version = 11 : i64} {
  func.func @kernel(%arg0: i32, %arg1: memref<8x128xf32, #tpu.memory_space<vmem>>, %arg2: memref<128x128xbf16, #tpu.memory_space<vmem>>, %arg3: memref<3x128x128xbf16, #tpu.memory_space<vmem>>, %arg4: memref<4x1x128xf32, #tpu.memory_space<vmem>>, %arg5: memref<1x128xf32, #tpu.memory_space<vmem>>, %arg6: memref<8x1xf32, #tpu.memory_space<vmem>>) attributes {dimension_semantics = [#tpu.dimension_semantics<parallel>], iteration_bounds = array<i64: 1>, scalar_prefetch = 0 : i64, scratch_operands = 0 : i64, tpu.core_type = #tpu.core_type<tc>, window_params = [{transform_indices = @transform_0, window_bounds = array<i64: 8, 128>}, {pipeline_mode = #tpu.pipeline_mode<synchronous>, transform_indices = @transform_1, window_bounds = array<i64: 128, 128>}, {pipeline_mode = #tpu.pipeline_mode<synchronous>, transform_indices = @transform_2, window_bounds = array<i64: 3, 128, 128>}, {pipeline_mode = #tpu.pipeline_mode<synchronous>, transform_indices = @transform_3, window_bounds = array<i64: 4, 1, 128>}, {pipeline_mode = #tpu.pipeline_mode<synchronous>, transform_indices = @transform_4, window_bounds = array<i64: 1, 128>}, {transform_indices = @transform_5, window_bounds = array<i64: 8, 1>}]} {
    %c0 = arith.constant 0 : index
    %c0_0 = arith.constant 0 : index
    %0 = vector.load %arg1[%c0, %c0_0] : memref<8x128xf32, #tpu.memory_space<vmem>>, vector<8x128xf32>
    %1 = arith.truncf %0 : vector<8x128xf32> to vector<8x128xbf16>
    %c0_1 = arith.constant 0 : index
    %c0_2 = arith.constant 0 : index
    %2 = vector.load %arg2[%c0_1, %c0_2] : memref<128x128xbf16, #tpu.memory_space<vmem>>, vector<128x128xbf16>
    %cst = arith.constant dense<0.000000e+00> : vector<8x128xf32>
    %3 = tpu.matmul %1, %2, %cst {dimension_numbers = #tpu.dot_dimension_numbers<[1], [0], [0], [1], [0, 0, 1, 1], [], []>} : vector<8x128xbf16>, vector<128x128xbf16>, vector<8x128xf32> -> vector<8x128xf32>
    %c0_3 = arith.constant 0 : index
    %c0_4 = arith.constant 0 : index
    %c0_5 = arith.constant 0 : index
    %4 = vector.load %arg4[%c0_3, %c0_4, %c0_5] : memref<4x1x128xf32, #tpu.memory_space<vmem>>, vector<1x1x128xf32>
    %5 = vector.shape_cast %4 : vector<1x1x128xf32> to vector<1x128xf32>
    %6 = vector.broadcast %5 : vector<1x128xf32> to vector<8x128xf32>
    %7 = arith.addf %3, %6 : vector<8x128xf32>
    %cst_6 = arith.constant 0.000000e+00 : f32
    %8 = vector.broadcast %cst_6 : f32 to vector<8x128xf32>
    %9 = arith.maximumf %7, %8 : vector<8x128xf32>
    %10 = arith.truncf %9 : vector<8x128xf32> to vector<8x128xbf16>
    %c0_7 = arith.constant 0 : index
    %c0_8 = arith.constant 0 : index
    %c0_9 = arith.constant 0 : index
    %11 = vector.load %arg3[%c0_7, %c0_8, %c0_9] : memref<3x128x128xbf16, #tpu.memory_space<vmem>>, vector<1x128x128xbf16>
    %12 = vector.shape_cast %11 : vector<1x128x128xbf16> to vector<128x128xbf16>
    %cst_10 = arith.constant dense<0.000000e+00> : vector<8x128xf32>
    %13 = tpu.matmul %10, %12, %cst_10 {dimension_numbers = #tpu.dot_dimension_numbers<[1], [0], [0], [1], [0, 0, 1, 1], [], []>} : vector<8x128xbf16>, vector<128x128xbf16>, vector<8x128xf32> -> vector<8x128xf32>
    %c1 = arith.constant 1 : index
    %c0_11 = arith.constant 0 : index
    %c0_12 = arith.constant 0 : index
    %14 = vector.load %arg4[%c1, %c0_11, %c0_12] : memref<4x1x128xf32, #tpu.memory_space<vmem>>, vector<1x1x128xf32>
    %15 = vector.shape_cast %14 : vector<1x1x128xf32> to vector<1x128xf32>
    %16 = vector.broadcast %15 : vector<1x128xf32> to vector<8x128xf32>
    %17 = arith.addf %13, %16 : vector<8x128xf32>
    %cst_13 = arith.constant 0.000000e+00 : f32
    %18 = vector.broadcast %cst_13 : f32 to vector<8x128xf32>
    %19 = arith.maximumf %17, %18 : vector<8x128xf32>
    %20 = arith.truncf %19 : vector<8x128xf32> to vector<8x128xbf16>
    %c1_14 = arith.constant 1 : index
    %c0_15 = arith.constant 0 : index
    %c0_16 = arith.constant 0 : index
    %21 = vector.load %arg3[%c1_14, %c0_15, %c0_16] : memref<3x128x128xbf16, #tpu.memory_space<vmem>>, vector<1x128x128xbf16>
    %22 = vector.shape_cast %21 : vector<1x128x128xbf16> to vector<128x128xbf16>
    %cst_17 = arith.constant dense<0.000000e+00> : vector<8x128xf32>
    %23 = tpu.matmul %20, %22, %cst_17 {dimension_numbers = #tpu.dot_dimension_numbers<[1], [0], [0], [1], [0, 0, 1, 1], [], []>} : vector<8x128xbf16>, vector<128x128xbf16>, vector<8x128xf32> -> vector<8x128xf32>
    %c2 = arith.constant 2 : index
    %c0_18 = arith.constant 0 : index
    %c0_19 = arith.constant 0 : index
    %24 = vector.load %arg4[%c2, %c0_18, %c0_19] : memref<4x1x128xf32, #tpu.memory_space<vmem>>, vector<1x1x128xf32>
    %25 = vector.shape_cast %24 : vector<1x1x128xf32> to vector<1x128xf32>
    %26 = vector.broadcast %25 : vector<1x128xf32> to vector<8x128xf32>
    %27 = arith.addf %23, %26 : vector<8x128xf32>
    %cst_20 = arith.constant 0.000000e+00 : f32
    %28 = vector.broadcast %cst_20 : f32 to vector<8x128xf32>
    %29 = arith.maximumf %27, %28 : vector<8x128xf32>
    %30 = arith.truncf %29 : vector<8x128xf32> to vector<8x128xbf16>
    %c2_21 = arith.constant 2 : index
    %c0_22 = arith.constant 0 : index
    %c0_23 = arith.constant 0 : index
    %31 = vector.load %arg3[%c2_21, %c0_22, %c0_23] : memref<3x128x128xbf16, #tpu.memory_space<vmem>>, vector<1x128x128xbf16>
    %32 = vector.shape_cast %31 : vector<1x128x128xbf16> to vector<128x128xbf16>
    %cst_24 = arith.constant dense<0.000000e+00> : vector<8x128xf32>
    %33 = tpu.matmul %30, %32, %cst_24 {dimension_numbers = #tpu.dot_dimension_numbers<[1], [0], [0], [1], [0, 0, 1, 1], [], []>} : vector<8x128xbf16>, vector<128x128xbf16>, vector<8x128xf32> -> vector<8x128xf32>
    %c3 = arith.constant 3 : index
    %c0_25 = arith.constant 0 : index
    %c0_26 = arith.constant 0 : index
    %34 = vector.load %arg4[%c3, %c0_25, %c0_26] : memref<4x1x128xf32, #tpu.memory_space<vmem>>, vector<1x1x128xf32>
    %35 = vector.shape_cast %34 : vector<1x1x128xf32> to vector<1x128xf32>
    %36 = vector.broadcast %35 : vector<1x128xf32> to vector<8x128xf32>
    %37 = arith.addf %33, %36 : vector<8x128xf32>
    %cst_27 = arith.constant 0.000000e+00 : f32
    %38 = vector.broadcast %cst_27 : f32 to vector<8x128xf32>
    %39 = arith.maximumf %37, %38 : vector<8x128xf32>
    %c0_28 = arith.constant 0 : index
    %c0_29 = arith.constant 0 : index
    %40 = vector.load %arg5[%c0_28, %c0_29] : memref<1x128xf32, #tpu.memory_space<vmem>>, vector<1x128xf32>
    %41 = vector.broadcast %40 : vector<1x128xf32> to vector<8x128xf32>
    %42 = arith.mulf %39, %41 : vector<8x128xf32>
    %cst_30 = arith.constant dense<0.000000e+00> : vector<8xf32>
    %43 = vector.multi_reduction <add>, %42, %cst_30 [1] : vector<8x128xf32> to vector<8xf32>
    %44 = vector.shape_cast %43 : vector<8xf32> to vector<8x1xf32>
    %c0_31 = arith.constant 0 : index
    %c0_32 = arith.constant 0 : index
    %45 = vector.load %arg6[%c0_31, %c0_32] : memref<8x1xf32, #tpu.memory_space<vmem>>, vector<8x1xf32>
    tpu.vector_store %arg6[%c0_31, %c0_32], %44 {strides = array<i32>} : memref<8x1xf32, #tpu.memory_space<vmem>>, vector<8x1xf32>,
    return
  }
  func.func @transform_0(%arg0: i32) -> (i32, i32) {
    %c0_i32 = arith.constant 0 : i32
    %c0_i32_0 = arith.constant 0 : i32
    return %arg0, %c0_i32 : i32, i32
  }
  func.func @transform_1(%arg0: i32) -> (i32, i32) {
    %c0_i32 = arith.constant 0 : i32
    %c0_i32_0 = arith.constant 0 : i32
    %c0_i32_1 = arith.constant 0 : i32
    return %c0_i32, %c0_i32_0 : i32, i32
  }
  func.func @transform_2(%arg0: i32) -> (i32, i32, i32) {
    %c0_i32 = arith.constant 0 : i32
    %c0_i32_0 = arith.constant 0 : i32
    %c0_i32_1 = arith.constant 0 : i32
    %c0_i32_2 = arith.constant 0 : i32
    return %c0_i32, %c0_i32_0, %c0_i32_1 : i32, i32, i32
  }
  func.func @transform_3(%arg0: i32) -> (i32, i32, i32) {
    %c0_i32 = arith.constant 0 : i32
    %c0_i32_0 = arith.constant 0 : i32
    %c0_i32_1 = arith.constant 0 : i32
    %c0_i32_2 = arith.constant 0 : i32
    return %c0_i32, %c0_i32_0, %c0_i32_1 : i32, i32, i32
  }
  func.func @transform_4(%arg0: i32) -> (i32, i32) {
    %c0_i32 = arith.constant 0 : i32
    %c0_i32_0 = arith.constant 0 : i32
    %c0_i32_1 = arith.constant 0 : i32
    return %c0_i32, %c0_i32_0 : i32, i32
  }
  func.func @transform_5(%arg0: i32) -> (i32, i32) {
    %c0_i32 = arith.constant 0 : i32
    %c0_i32_0 = arith.constant 0 : i32
    return %arg0, %c0_i32 : i32, i32
  }
}

</mosaic_0001>

<llo_original>
// kernel: mul.32
$region0: #{mul.32}
  #allocation0 [shape = 's32[1]{0}', space=sflag, size = 0x4, scoped, tag = 'scoped memory for mul.32']
  %s0 = inlined_call_operand.vmem [shape: f32[2,24], index: 0, kind: input, shape index: {}]
  %s1 = inlined_call_operand.vmem [shape: f32[2,4,24], index: 1, kind: output, shape index: {}]
  // Predicated region
  $region2: #{mul.32} parent=0 // pred_check
    _
  $region3: #{mul.32} parent=0 // pred_check_branch
    %3 = sbr.rel (0) target = $region5
  $region4: #{mul.32} parent=0 // pred_region
    _
  $region5: #{mul.32} parent=0 // pred_fallthru
    _
  %v4 = vld [vmem:[%s0] ss:$0 sm:$0xff]
  %5 = vst [vmem:[%s1] sm:$0xf] %v4
  %s6 = scalar_lea.vmem %s0, 1
  %v7 = vld [vmem:[%s6] ss:$0 sm:$0xff]
  %s8 = scalar_lea.vmem %s1, 4
  %9 = vst [vmem:[%s8] sm:$0xf] %v7

// kernel: subgnn_forward.3
$region0: #{subgnn_forward.3}
  #allocation0 [shape = 'u32[]', space=smem, size = 0x4, offset = 0x4, fixed_abs, tag = 'smem constant byte address 0x4 - core index']
  #allocation1 [shape = 'u32[144,128]{1,0:T(1,128)}', space=vmem, size = 0x12000, scoped, tag = 'internal scratch']
  %s0 = inlined_call_operand.vmem [shape: f32[8,128], index: 0, kind: input, shape index: {}]
  %s1 = inlined_call_operand.vmem [shape: bf16[128,128], index: 1, kind: input, shape index: {}]
  %s2 = inlined_call_operand.vmem [shape: bf16[3,128,128], index: 2, kind: input, shape index: {}]
  %s3 = inlined_call_operand.vmem [shape: f32[4,1,128], index: 3, kind: input, shape index: {}]
  %s4 = inlined_call_operand.vmem [shape: f32[1,128], index: 4, kind: input, shape index: {}]
  %s5 = inlined_call_operand.vmem [shape: f32[8,1], index: 5, kind: output, shape index: {}]
  %s6 = sld [smem:[#allocation0]]
  $region30: #{subgnn_forward.3} parent=0
    _
  %s8 = ssub.s32 1, %s6
  %s9 = scalar_select 0, %s8, %s6
  // Predicated region
  $region2: #{subgnn_forward.3} parent=0 // pred_check
    _
  $region3: #{subgnn_forward.3} parent=0 // pred_check_branch
    %11 = sbr.rel (0) target = $region5
  $region4: #{subgnn_forward.3} parent=0 // pred_region
    _
  $region5: #{subgnn_forward.3} parent=0 // pred_fallthru
    _
  // Predicated region
  $region6: #{subgnn_forward.3} parent=0 // pred_check
    _
  $region7: #{subgnn_forward.3} parent=0 // pred_check_branch
    %13 = sbr.rel (0) target = $region9
  $region8: #{subgnn_forward.3} parent=0 // pred_region
    _
  $region9: #{subgnn_forward.3} parent=0 // pred_fallthru
    _
  // Predicated region
  $region10: #{subgnn_forward.3} parent=0 // pred_check
    _
  $region11: #{subgnn_forward.3} parent=0 // pred_check_branch
    %15 = sbr.rel (0) target = $region13
  $region12: #{subgnn_forward.3} parent=0 // pred_region
    _
  $region13: #{subgnn_forward.3} parent=0 // pred_fallthru
    _
  // Predicated region
  $region14: #{subgnn_forward.3} parent=0 // pred_check
    _
  $region15: #{subgnn_forward.3} parent=0 // pred_check_branch
    %17 = sbr.rel (0) target = $region17
  $region16: #{subgnn_forward.3} parent=0 // pred_region
    _
  $region17: #{subgnn_forward.3} parent=0 // pred_fallthru
    _
  // Predicated region
  $region18: #{subgnn_forward.3} parent=0 // pred_check
    _
  $region19: #{subgnn_forward.3} parent=0 // pred_check_branch
    %19 = sbr.rel (0) target = $region21
  $region20: #{subgnn_forward.3} parent=0 // pred_region
    _
  $region21: #{subgnn_forward.3} parent=0 // pred_fallthru
    _
  %v21 = vld [vmem:[%s0] sm:$0xff]
  %v22 = vpack.c.bf16 %v21, %v21
  %v23 = vld [vmem:[%s1] sm:$0xf]
  %v24 = vld [vmem:[%s1 + $0x4] sm:$0xf]
  %v25 = vld [vmem:[%s1 + $0x8] sm:$0xf]
  %v26 = vld [vmem:[%s1 + $0xc] sm:$0xf]
  %v27 = vld [vmem:[%s1 + $0x10] sm:$0xf]
  %v28 = vld [vmem:[%s1 + $0x14] sm:$0xf]
  %v29 = vld [vmem:[%s1 + $0x18] sm:$0xf]
  %v30 = vld [vmem:[%s1 + $0x1c] sm:$0xf]
  %v31 = vld [vmem:[%s1 + $0x20] sm:$0xf]
  %v32 = vld [vmem:[%s1 + $0x24] sm:$0xf]
  %v33 = vld [vmem:[%s1 + $0x28] sm:$0xf]
  %v34 = vld [vmem:[%s1 + $0x2c] sm:$0xf]
  %v35 = vld [vmem:[%s1 + $0x30] sm:$0xf]
  %v36 = vld [vmem:[%s1 + $0x34] sm:$0xf]
  %v37 = vld [vmem:[%s1 + $0x38] sm:$0xf]
  %v38 = vld [vmem:[%s1 + $0x3c] sm:$0xf]
  %v39 = vld [vmem:[%s3] sm:$0x1]
  %v41 = vlaneseq
  %v42 = vshrl.u32 %v41, 7
  %v43 = vsub.s32 0, %v42
  %v44 = vrot.slane %v39, %v43
  %v62 = vunpack.c.l.b16 %v23
  %v63 = vunpack.c.l.b16 %v24
  %v64 = vunpack.c.l.b16 %v25
  %v65 = vunpack.c.l.b16 %v26
  %v66 = vunpack.c.l.b16 %v27
  %v67 = vunpack.c.l.b16 %v28
  %v68 = vunpack.c.l.b16 %v29
  %v69 = vunpack.c.l.b16 %v30
  %v70 = vunpack.c.l.b16 %v31
  %v71 = vunpack.c.l.b16 %v32
  %v72 = vunpack.c.l.b16 %v33
  %v73 = vunpack.c.l.b16 %v34
  %v74 = vunpack.c.l.b16 %v35
  %v75 = vunpack.c.l.b16 %v36
  %v76 = vunpack.c.l.b16 %v37
  %v77 = vunpack.c.l.b16 %v38
  %v78 = vpack.c.b16 %v63, %v62
  %v79 = vpack.c.b16 %v65, %v64
  %v80 = vpack.c.b16 %v67, %v66
  %v81 = vpack.c.b16 %v69, %v68
  %v82 = vpack.c.b16 %v71, %v70
  %v83 = vpack.c.b16 %v73, %v72
  %v84 = vpack.c.b16 %v75, %v74
  %v85 = vpack.c.b16 %v77, %v76
  %94 = vmatprep.subr.bf16.mxu0 0
  %95 = vmatpush1.bf16.msra.mxu0 %v85
  %96 = vmatprep.subr.bf16.mxu0 0
  %97 = vmatpush1.bf16.msra.mxu0 %v84
  %98 = vmatprep.subr.bf16.mxu0 0
  %99 = vmatpush1.bf16.msra.mxu0 %v83
  %100 = vmatprep.subr.bf16.mxu0 0
  %101 = vmatpush1.bf16.msra.mxu0 %v82
  %102 = vmatprep.subr.bf16.mxu0 0
  %103 = vmatpush1.bf16.msra.mxu0 %v81
  %104 = vmatprep.subr.bf16.mxu0 0
  %105 = vmatpush1.bf16.msra.mxu0 %v80
  %106 = vmatprep.subr.bf16.mxu0 0
  %107 = vmatpush1.bf16.msra.mxu0 %v79
  %108 = vmatprep.subr.bf16.mxu0 0
  %109 = vmatpush1.bf16.msra.mxu0 %v78
  %110 = vmatprep.subr.bf16.mxu0 0
  %111 = vmatpush2.bf16.msra.mxu0 0
  %112 = vmatprep.subr.bf16.mxu0 0
  %113 = vmatpush2.bf16.msra.mxu0 0
  %114 = vmatprep.subr.bf16.mxu0 0
  %115 = vmatpush2.bf16.msra.mxu0 0
  %116 = vmatprep.subr.bf16.mxu0 0
  %117 = vmatpush2.bf16.msra.mxu0 0
  %118 = vmatprep.subr.bf16.mxu0 0
  %119 = vmatpush2.bf16.msra.mxu0 0
  %120 = vmatprep.subr.bf16.mxu0 0
  %121 = vmatpush2.bf16.msra.mxu0 0
  %122 = vmatprep.subr.bf16.mxu0 0
  %123 = vmatpush2.bf16.msra.mxu0 0
  %124 = vmatprep.subr.bf16.mxu0 0
  %125 = vmatpush2.bf16.msra.mxu0 0
  %126 = vmatprep.mubr.bf16.mxu0 0
  %127 = vmatmul.mubr.bf16.gmra.mxu0 %v22
  %v128 = vpop.f32.mrf.mxu0
  %v129 = vadd.f32 %v44, %v128
  %v130 = vpop.f32.mrf.mxu0
  %v131 = vpop.f32.mrf.mxu0
  %v132 = vpop.f32.mrf.mxu0
  %133 = vdwg.mxu0
  %v134 = vmax.f32 %v129, 0.0
  %v135 = vpack.c.bf16 %v134, %v134
  %v136 = vld [vmem:[%s2] sm:$0xf]
  %v137 = vld [vmem:[%s2 + $0x4] sm:$0xf]
  %v138 = vld [vmem:[%s2 + $0x8] sm:$0xf]
  %v139 = vld [vmem:[%s2 + $0xc] sm:$0xf]
  %v140 = vld [vmem:[%s2 + $0x10] sm:$0xf]
  %v141 = vld [vmem:[%s2 + $0x14] sm:$0xf]
  %v142 = vld [vmem:[%s2 + $0x18] sm:$0xf]
  %v143 = vld [vmem:[%s2 + $0x1c] sm:$0xf]
  %v144 = vld [vmem:[%s2 + $0x20] sm:$0xf]
  %v145 = vld [vmem:[%s2 + $0x24] sm:$0xf]
  %v146 = vld [vmem:[%s2 + $0x28] sm:$0xf]
  %v147 = vld [vmem:[%s2 + $0x2c] sm:$0xf]
  %v148 = vld [vmem:[%s2 + $0x30] sm:$0xf]
  %v149 = vld [vmem:[%s2 + $0x34] sm:$0xf]
  %v150 = vld [vmem:[%s2 + $0x38] sm:$0xf]
  %v151 = vld [vmem:[%s2 + $0x3c] sm:$0xf]
  %s152 = scalar_lea.vmem %s3, 1
  %v153 = vld [vmem:[%s152] sm:$0x1]
  %v155 = vlaneseq
  %v156 = vshrl.u32 %v155, 7
  %v157 = vsub.s32 0, %v156
  %v158 = vrot.slane %v153, %v157
  %v176 = vunpack.c.l.b16 %v136
  %v177 = vunpack.c.l.b16 %v137
  %v178 = vunpack.c.l.b16 %v138
  %v179 = vunpack.c.l.b16 %v139
  %v180 = vunpack.c.l.b16 %v140
  %v181 = vunpack.c.l.b16 %v141
  %v182 = vunpack.c.l.b16 %v142
  %v183 = vunpack.c.l.b16 %v143
  %v184 = vunpack.c.l.b16 %v144
  %v185 = vunpack.c.l.b16 %v145
  %v186 = vunpack.c.l.b16 %v146
  %v187 = vunpack.c.l.b16 %v147
  %v188 = vunpack.c.l.b16 %v148
  %v189 = vunpack.c.l.b16 %v149
  %v190 = vunpack.c.l.b16 %v150
  %v191 = vunpack.c.l.b16 %v151
  %v192 = vpack.c.b16 %v177, %v176
  %v193 = vpack.c.b16 %v179, %v178
  %v194 = vpack.c.b16 %v181, %v180
  %v195 = vpack.c.b16 %v183, %v182
  %v196 = vpack.c.b16 %v185, %v184
  %v197 = vpack.c.b16 %v187, %v186
  %v198 = vpack.c.b16 %v189, %v188
  %v199 = vpack.c.b16 %v191, %v190
  %208 = vmatprep.subr.bf16.mxu0 0
  %209 = vmatpush1.bf16.msra.mxu0 %v199
  %210 = vmatprep.subr.bf16.mxu0 0
  %211 = vmatpush1.bf16.msra.mxu0 %v198
  %212 = vmatprep.subr.bf16.mxu0 0
  %213 = vmatpush1.bf16.msra.mxu0 %v197
  %214 = vmatprep.subr.bf16.mxu0 0
  %215 = vmatpush1.bf16.msra.mxu0 %v196
  %216 = vmatprep.subr.bf16.mxu0 0
  %217 = vmatpush1.bf16.msra.mxu0 %v195
  %218 = vmatprep.subr.bf16.mxu0 0
  %219 = vmatpush1.bf16.msra.mxu0 %v194
  %220 = vmatprep.subr.bf16.mxu0 0
  %221 = vmatpush1.bf16.msra.mxu0 %v193
  %222 = vmatprep.subr.bf16.mxu0 0
  %223 = vmatpush1.bf16.msra.mxu0 %v192
  %224 = vmatprep.subr.bf16.mxu0 0
  %225 = vmatpush2.bf16.msra.mxu0 0
  %226 = vmatprep.subr.bf16.mxu0 0
  %227 = vmatpush2.bf16.msra.mxu0 0
  %228 = vmatprep.subr.bf16.mxu0 0
  %229 = vmatpush2.bf16.msra.mxu0 0
  %230 = vmatprep.subr.bf16.mxu0 0
  %231 = vmatpush2.bf16.msra.mxu0 0
  %232 = vmatprep.subr.bf16.mxu0 0
  %233 = vmatpush2.bf16.msra.mxu0 0
  %234 = vmatprep.subr.bf16.mxu0 0
  %235 = vmatpush2.bf16.msra.mxu0 0
  %236 = vmatprep.subr.bf16.mxu0 0
  %237 = vmatpush2.bf16.msra.mxu0 0
  %238 = vmatprep.subr.bf16.mxu0 0
  %239 = vmatpush2.bf16.msra.mxu0 0
  %240 = vmatprep.mubr.bf16.mxu0 0
  %241 = vmatmul.mubr.bf16.gmra.mxu0 %v135
  %v242 = vpop.f32.mrf.mxu0
  %v243 = vadd.f32 %v158, %v242
  %v244 = vpop.f32.mrf.mxu0
  %v245 = vpop.f32.mrf.mxu0
  %v246 = vpop.f32.mrf.mxu0
  %247 = vdwg.mxu0
  %v248 = vmax.f32 %v243, 0.0
  %v249 = vpack.c.bf16 %v248, %v248
  %s250 = scalar_lea.vmem %s2, 64
  %v251 = vld [vmem:[%s250] sm:$0xf]
  %v252 = vld [vmem:[%s250 + $0x4] sm:$0xf]
  %v253 = vld [vmem:[%s250 + $0x8] sm:$0xf]
  %v254 = vld [vmem:[%s250 + $0xc] sm:$0xf]
  %v255 = vld [vmem:[%s250 + $0x10] sm:$0xf]
  %v256 = vld [vmem:[%s250 + $0x14] sm:$0xf]
  %v257 = vld [vmem:[%s250 + $0x18] sm:$0xf]
  %v258 = vld [vmem:[%s250 + $0x1c] sm:$0xf]
  %v259 = vld [vmem:[%s250 + $0x20] sm:$0xf]
  %v260 = vld [vmem:[%s250 + $0x24] sm:$0xf]
  %v261 = vld [vmem:[%s250 + $0x28] sm:$0xf]
  %v262 = vld [vmem:[%s250 + $0x2c] sm:$0xf]
  %v263 = vld [vmem:[%s250 + $0x30] sm:$0xf]
  %v264 = vld [vmem:[%s250 + $0x34] sm:$0xf]
  %v265 = vld [vmem:[%s250 + $0x38] sm:$0xf]
  %v266 = vld [vmem:[%s250 + $0x3c] sm:$0xf]
  %s267 = scalar_lea.vmem %s3, 2
  %v268 = vld [vmem:[%s267] sm:$0x1]
  %v270 = vlaneseq
  %v271 = vshrl.u32 %v270, 7
  %v272 = vsub.s32 0, %v271
  %v273 = vrot.slane %v268, %v272
  %v291 = vunpack.c.l.b16 %v251
  %v292 = vunpack.c.l.b16 %v252
  %v293 = vunpack.c.l.b16 %v253
  %v294 = vunpack.c.l.b16 %v254
  %v295 = vunpack.c.l.b16 %v255
  %v296 = vunpack.c.l.b16 %v256
  %v297 = vunpack.c.l.b16 %v257
  %v298 = vunpack.c.l.b16 %v258
  %v299 = vunpack.c.l.b16 %v259
  %v300 = vunpack.c.l.b16 %v260
  %v301 = vunpack.c.l.b16 %v261
  %v302 = vunpack.c.l.b16 %v262
  %v303 = vunpack.c.l.b16 %v263
  %v304 = vunpack.c.l.b16 %v264
  %v305 = vunpack.c.l.b16 %v265
  %v306 = vunpack.c.l.b16 %v266
  %v307 = vpack.c.b16 %v292, %v291
  %v308 = vpack.c.b16 %v294, %v293
  %v309 = vpack.c.b16 %v296, %v295
  %v310 = vpack.c.b16 %v298, %v297
  %v311 = vpack.c.b16 %v300, %v299
  %v312 = vpack.c.b16 %v302, %v301
  %v313 = vpack.c.b16 %v304, %v303
  %v314 = vpack.c.b16 %v306, %v305
  %323 = vmatprep.subr.bf16.mxu0 0
  %324 = vmatpush1.bf16.msra.mxu0 %v314
  %325 = vmatprep.subr.bf16.mxu0 0
  %326 = vmatpush1.bf16.msra.mxu0 %v313
  %327 = vmatprep.subr.bf16.mxu0 0
  %328 = vmatpush1.bf16.msra.mxu0 %v312
  %329 = vmatprep.subr.bf16.mxu0 0
  %330 = vmatpush1.bf16.msra.mxu0 %v311
  %331 = vmatprep.subr.bf16.mxu0 0
  %332 = vmatpush1.bf16.msra.mxu0 %v310
  %333 = vmatprep.subr.bf16.mxu0 0
  %334 = vmatpush1.bf16.msra.mxu0 %v309
  %335 = vmatprep.subr.bf16.mxu0 0
  %336 = vmatpush1.bf16.msra.mxu0 %v308
  %337 = vmatprep.subr.bf16.mxu0 0
  %338 = vmatpush1.bf16.msra.mxu0 %v307
  %339 = vmatprep.subr.bf16.mxu0 0
  %340 = vmatpush2.bf16.msra.mxu0 0
  %341 = vmatprep.subr.bf16.mxu0 0
  %342 = vmatpush2.bf16.msra.mxu0 0
  %343 = vmatprep.subr.bf16.mxu0 0
  %344 = vmatpush2.bf16.msra.mxu0 0
  %345 = vmatprep.subr.bf16.mxu0 0
  %346 = vmatpush2.bf16.msra.mxu0 0
  %347 = vmatprep.subr.bf16.mxu0 0
  %348 = vmatpush2.bf16.msra.mxu0 0
  %349 = vmatprep.subr.bf16.mxu0 0
  %350 = vmatpush2.bf16.msra.mxu0 0
  %351 = vmatprep.subr.bf16.mxu0 0
  %352 = vmatpush2.bf16.msra.mxu0 0
  %353 = vmatprep.subr.bf16.mxu0 0
  %354 = vmatpush2.bf16.msra.mxu0 0
  %355 = vmatprep.mubr.bf16.mxu0 0
  %356 = vmatmul.mubr.bf16.gmra.mxu0 %v249
  %v357 = vpop.f32.mrf.mxu0
  %v358 = vadd.f32 %v273, %v357
  %v359 = vpop.f32.mrf.mxu0
  %v360 = vpop.f32.mrf.mxu0
  %v361 = vpop.f32.mrf.mxu0
  %362 = vdwg.mxu0
  %v363 = vmax.f32 %v358, 0.0
  %v364 = vpack.c.bf16 %v363, %v363
  %s365 = scalar_lea.vmem %s2, 128
  %v366 = vld [vmem:[%s365] sm:$0xf]
  %v367 = vld [vmem:[%s365 + $0x4] sm:$0xf]
  %v368 = vld [vmem:[%s365 + $0x8] sm:$0xf]
  %v369 = vld [vmem:[%s365 + $0xc] sm:$0xf]
  %v370 = vld [vmem:[%s365 + $0x10] sm:$0xf]
  %v371 = vld [vmem:[%s365 + $0x14] sm:$0xf]
  %v372 = vld [vmem:[%s365 + $0x18] sm:$0xf]
  %v373 = vld [vmem:[%s365 + $0x1c] sm:$0xf]
  %v374 = vld [vmem:[%s365 + $0x20] sm:$0xf]
  %v375 = vld [vmem:[%s365 + $0x24] sm:$0xf]
  %v376 = vld [vmem:[%s365 + $0x28] sm:$0xf]
  %v377 = vld [vmem:[%s365 + $0x2c] sm:$0xf]
  %v378 = vld [vmem:[%s365 + $0x30] sm:$0xf]
  %v379 = vld [vmem:[%s365 + $0x34] sm:$0xf]
  %v380 = vld [vmem:[%s365 + $0x38] sm:$0xf]
  %v381 = vld [vmem:[%s365 + $0x3c] sm:$0xf]
  %s382 = scalar_lea.vmem %s3, 3
  %v383 = vld [vmem:[%s382] sm:$0x1]
  %v385 = vlaneseq
  %v386 = vshrl.u32 %v385, 7
  %v387 = vsub.s32 0, %v386
  %v388 = vrot.slane %v383, %v387
  %v406 = vunpack.c.l.b16 %v366
  %v407 = vunpack.c.l.b16 %v367
  %v408 = vunpack.c.l.b16 %v368
  %v409 = vunpack.c.l.b16 %v369
  %v410 = vunpack.c.l.b16 %v370
  %v411 = vunpack.c.l.b16 %v371
  %v412 = vunpack.c.l.b16 %v372
  %v413 = vunpack.c.l.b16 %v373
  %v414 = vunpack.c.l.b16 %v374
  %v415 = vunpack.c.l.b16 %v375
  %v416 = vunpack.c.l.b16 %v376
  %v417 = vunpack.c.l.b16 %v377
  %v418 = vunpack.c.l.b16 %v378
  %v419 = vunpack.c.l.b16 %v379
  %v420 = vunpack.c.l.b16 %v380
  %v421 = vunpack.c.l.b16 %v381
  %v422 = vpack.c.b16 %v407, %v406
  %v423 = vpack.c.b16 %v409, %v408
  %v424 = vpack.c.b16 %v411, %v410
  %v425 = vpack.c.b16 %v413, %v412
  %v426 = vpack.c.b16 %v415, %v414
  %v427 = vpack.c.b16 %v417, %v416
  %v428 = vpack.c.b16 %v419, %v418
  %v429 = vpack.c.b16 %v421, %v420
  %438 = vmatprep.subr.bf16.mxu0 0
  %439 = vmatpush1.bf16.msra.mxu0 %v429
  %440 = vmatprep.subr.bf16.mxu0 0
  %441 = vmatpush1.bf16.msra.mxu0 %v428
  %442 = vmatprep.subr.bf16.mxu0 0
  %443 = vmatpush1.bf16.msra.mxu0 %v427
  %444 = vmatprep.subr.bf16.mxu0 0
  %445 = vmatpush1.bf16.msra.mxu0 %v426
  %446 = vmatprep.subr.bf16.mxu0 0
  %447 = vmatpush1.bf16.msra.mxu0 %v425
  %448 = vmatprep.subr.bf16.mxu0 0
  %449 = vmatpush1.bf16.msra.mxu0 %v424
  %450 = vmatprep.subr.bf16.mxu0 0
  %451 = vmatpush1.bf16.msra.mxu0 %v423
  %452 = vmatprep.subr.bf16.mxu0 0
  %453 = vmatpush1.bf16.msra.mxu0 %v422
  %454 = vmatprep.subr.bf16.mxu0 0
  %455 = vmatpush2.bf16.msra.mxu0 0
  %456 = vmatprep.subr.bf16.mxu0 0
  %457 = vmatpush2.bf16.msra.mxu0 0
  %458 = vmatprep.subr.bf16.mxu0 0
  %459 = vmatpush2.bf16.msra.mxu0 0
  %460 = vmatprep.subr.bf16.mxu0 0
  %461 = vmatpush2.bf16.msra.mxu0 0
  %462 = vmatprep.subr.bf16.mxu0 0
  %463 = vmatpush2.bf16.msra.mxu0 0
  %464 = vmatprep.subr.bf16.mxu0 0
  %465 = vmatpush2.bf16.msra.mxu0 0
  %466 = vmatprep.subr.bf16.mxu0 0
  %467 = vmatpush2.bf16.msra.mxu0 0
  %468 = vmatprep.subr.bf16.mxu0 0
  %469 = vmatpush2.bf16.msra.mxu0 0
  %470 = vmatprep.mubr.bf16.mxu0 0
  %471 = vmatmul.mubr.bf16.gmra.mxu0 %v364
  %v472 = vpop.f32.mrf.mxu0
  %v473 = vadd.f32 %v388, %v472
  %v474 = vpop.f32.mrf.mxu0
  %v475 = vpop.f32.mrf.mxu0
  %v476 = vpop.f32.mrf.mxu0
  %477 = vdwg.mxu0
  %v478 = vmax.f32 %v473, 0.0
  %v479 = vld [vmem:[%s4] sm:$0x1]
  %v481 = vlaneseq
  %v482 = vshrl.u32 %v481, 7
  %v483 = vsub.s32 0, %v482
  %v484 = vrot.slane %v479, %v483
  %v486 = vmul.f32 %v478, %v484
  %487 = vadd.xlane.f32.xlu0 %v486
  %v488 = vpop.xlane.xlu0 %487
  %vm489 = vcmask 7168
  %490 = vst.msk [vmem:[%s5] sm:$0xff] %vm489, %v488
  // Predicated region
  $region22: #{subgnn_forward.3} parent=0 // pred_check
    _
  $region23: #{subgnn_forward.3} parent=0 // pred_check_branch
    %492 = sbr.rel (0) target = $region25
  $region24: #{subgnn_forward.3} parent=0 // pred_region
    _
  $region25: #{subgnn_forward.3} parent=0 // pred_fallthru
    _
  // Predicated region
  $region26: #{subgnn_forward.3} parent=0 // pred_check
    _
  $region27: #{subgnn_forward.3} parent=0 // pred_check_branch
    %494 = sbr.rel (0) target = $region29
  $region28: #{subgnn_forward.3} parent=0 // pred_region
    _
  $region29: #{subgnn_forward.3} parent=0 // pred_fallthru
    _

// kernel: subgnn_forward.2
$region0: #{subgnn_forward.2}
  #allocation0 [shape = 'u32[]', space=smem, size = 0x4, offset = 0x4, fixed_abs, tag = 'smem constant byte address 0x4 - core index']
  #allocation1 [shape = 'u32[144,128]{1,0:T(1,128)}', space=vmem, size = 0x12000, scoped, tag = 'internal scratch']
  %s0 = inlined_call_operand.vmem [shape: f32[32,256], index: 0, kind: input, shape index: {}]
  %s1 = inlined_call_operand.vmem [shape: bf16[256,128], index: 1, kind: input, shape index: {}]
  %s2 = inlined_call_operand.vmem [shape: bf16[3,128,128], index: 2, kind: input, shape index: {}]
  %s3 = inlined_call_operand.vmem [shape: f32[4,1,128], index: 3, kind: input, shape index: {}]
  %s4 = inlined_call_operand.vmem [shape: f32[1,128], index: 4, kind: input, shape index: {}]
  %s5 = inlined_call_operand.vmem [shape: bf16[256,128], index: 5, kind: input, shape index: {}]
  %s6 = inlined_call_operand.vmem [shape: bf16[3,128,128], index: 6, kind: input, shape index: {}]
  %s7 = inlined_call_operand.vmem [shape: f32[4,1,128], index: 7, kind: input, shape index: {}]
  %s8 = inlined_call_operand.vmem [shape: f32[1,128], index: 8, kind: input, shape index: {}]
  %s9 = inlined_call_operand.vmem [shape: f32[32,1], index: 9, kind: output, shape index: {0}]
  %s10 = inlined_call_operand.vmem [shape: f32[32,1], index: 10, kind: output, shape index: {1}]
  %11 = xla_tuple %s9, %s10
  %s12 = sld [smem:[#allocation0]]
  $region54: #{subgnn_forward.2} parent=0
    _
  %s14 = ssub.s32 1, %s12
  %s15 = scalar_select 0, %s14, %s12
  // Predicated region
  $region2: #{subgnn_forward.2} parent=0 // pred_check
    _
  $region3: #{subgnn_forward.2} parent=0 // pred_check_branch
    %17 = sbr.rel (0) target = $region5
  $region4: #{subgnn_forward.2} parent=0 // pred_region
    _
  $region5: #{subgnn_forward.2} parent=0 // pred_fallthru
    _
  // Predicated region
  $region6: #{subgnn_forward.2} parent=0 // pred_check
    _
  $region7: #{subgnn_forward.2} parent=0 // pred_check_branch
    %19 = sbr.rel (0) target = $region9
  $region8: #{subgnn_forward.2} parent=0 // pred_region
    _
  $region9: #{subgnn_forward.2} parent=0 // pred_fallthru
    _
  // Predicated region
  $region10: #{subgnn_forward.2} parent=0 // pred_check
    _
  $region11: #{subgnn_forward.2} parent=0 // pred_check_branch
    %21 = sbr.rel (0) target = $region13
  $region12: #{subgnn_forward.2} parent=0 // pred_region
    _
  $region13: #{subgnn_forward.2} parent=0 // pred_fallthru
    _
  // Predicated region
  $region14: #{subgnn_forward.2} parent=0 // pred_check
    _
  $region15: #{subgnn_forward.2} parent=0 // pred_check_branch
    %23 = sbr.rel (0) target = $region17
  $region16: #{subgnn_forward.2} parent=0 // pred_region
    _
  $region17: #{subgnn_forward.2} parent=0 // pred_fallthru
    _
  // Predicated region
  $region18: #{subgnn_forward.2} parent=0 // pred_check
    _
  $region19: #{subgnn_forward.2} parent=0 // pred_check_branch
    %25 = sbr.rel (0) target = $region21
  $region20: #{subgnn_forward.2} parent=0 // pred_region
    _
  $region21: #{subgnn_forward.2} parent=0 // pred_fallthru
    _
  // Predicated region
  $region22: #{subgnn_forward.2} parent=0 // pred_check
    _
  $region23: #{subgnn_forward.2} parent=0 // pred_check_branch
    %27 = sbr.rel (0) target = $region25
  $region24: #{subgnn_forward.2} parent=0 // pred_region
    _
  $region25: #{subgnn_forward.2} parent=0 // pred_fallthru
    _
  // Predicated region
  $region26: #{subgnn_forward.2} parent=0 // pred_check
    _
  $region27: #{subgnn_forward.2} parent=0 // pred_check_branch
    %29 = sbr.rel (0) target = $region29
  $region28: #{subgnn_forward.2} parent=0 // pred_region
    _
  $region29: #{subgnn_forward.2} parent=0 // pred_fallthru
    _
  // Predicated region
  $region30: #{subgnn_forward.2} parent=0 // pred_check
    _
  $region31: #{subgnn_forward.2} parent=0 // pred_check_branch
    %31 = sbr.rel (0) target = $region33
  $region32: #{subgnn_forward.2} parent=0 // pred_region
    _
  $region33: #{subgnn_forward.2} parent=0 // pred_fallthru
    _
  // Predicated region
  $region34: #{subgnn_forward.2} parent=0 // pred_check
    _
  $region35: #{subgnn_forward.2} parent=0 // pred_check_branch
    %33 = sbr.rel (0) target = $region37
  $region36: #{subgnn_forward.2} parent=0 // pred_region
    _
  $region37: #{subgnn_forward.2} parent=0 // pred_fallthru
    _
  %v35 = vld [vmem:[%s0] sm:$0xff]
  %v36 = vld [vmem:[%s0 + $0x8] sm:$0xff]
  %v37 = vld [vmem:[%s0 + $0x10] sm:$0xff]
  %v38 = vld [vmem:[%s0 + $0x18] sm:$0xff]
  %v39 = vld [vmem:[%s0 + $0x20] sm:$0xff]
  %v40 = vld [vmem:[%s0 + $0x28] sm:$0xff]
  %v41 = vld [vmem:[%s0 + $0x30] sm:$0xff]
  %v42 = vld [vmem:[%s0 + $0x38] sm:$0xff]
  %v43 = vpack.c.bf16 %v37, %v35
  %v44 = vpack.c.bf16 %v38, %v36
  %v45 = vpack.c.bf16 %v41, %v39
  %v46 = vpack.c.bf16 %v42, %v40
  %v47 = vld [vmem:[%s1] sm:$0xf]
  %v48 = vld [vmem:[%s1 + $0x4] sm:$0xf]
  %v49 = vld [vmem:[%s1 + $0x8] sm:$0xf]
  %v50 = vld [vmem:[%s1 + $0xc] sm:$0xf]
  %v51 = vld [vmem:[%s1 + $0x10] sm:$0xf]
  %v52 = vld [vmem:[%s1 + $0x14] sm:$0xf]
  %v53 = vld [vmem:[%s1 + $0x18] sm:$0xf]
  %v54 = vld [vmem:[%s1 + $0x1c] sm:$0xf]
  %v55 = vld [vmem:[%s1 + $0x20] sm:$0xf]
  %v56 = vld [vmem:[%s1 + $0x24] sm:$0xf]
  %v57 = vld [vmem:[%s1 + $0x28] sm:$0xf]
  %v58 = vld [vmem:[%s1 + $0x2c] sm:$0xf]
  %v59 = vld [vmem:[%s1 + $0x30] sm:$0xf]
  %v60 = vld [vmem:[%s1 + $0x34] sm:$0xf]
  %v61 = vld [vmem:[%s1 + $0x38] sm:$0xf]
  %v62 = vld [vmem:[%s1 + $0x3c] sm:$0xf]
  %v63 = vld [vmem:[%s1 + $0x40] sm:$0xf]
  %v64 = vld [vmem:[%s1 + $0x44] sm:$0xf]
  %v65 = vld [vmem:[%s1 + $0x48] sm:$0xf]
  %v66 = vld [vmem:[%s1 + $0x4c] sm:$0xf]
  %v67 = vld [vmem:[%s1 + $0x50] sm:$0xf]
  %v68 = vld [vmem:[%s1 + $0x54] sm:$0xf]
  %v69 = vld [vmem:[%s1 + $0x58] sm:$0xf]
  %v70 = vld [vmem:[%s1 + $0x5c] sm:$0xf]
  %v71 = vld [vmem:[%s1 + $0x60] sm:$0xf]
  %v72 = vld [vmem:[%s1 + $0x64] sm:$0xf]
  %v73 = vld [vmem:[%s1 + $0x68] sm:$0xf]
  %v74 = vld [vmem:[%s1 + $0x6c] sm:$0xf]
  %v75 = vld [vmem:[%s1 + $0x70] sm:$0xf]
  %v76 = vld [vmem:[%s1 + $0x74] sm:$0xf]
  %v77 = vld [vmem:[%s1 + $0x78] sm:$0xf]
  %v78 = vld [vmem:[%s1 + $0x7c] sm:$0xf]
  %v79 = vld [vmem:[%s3] sm:$0x1]
  %v81 = vlaneseq
  %v82 = vshrl.u32 %v81, 7
  %v83 = vsub.s32 0, %v82
  %v84 = vrot.slane %v79, %v83
  %v118 = vunpack.c.l.b16 %v47
  %v119 = vunpack.c.l.b16 %v48
  %v120 = vunpack.c.l.b16 %v49
  %v121 = vunpack.c.l.b16 %v50
  %v122 = vunpack.c.l.b16 %v51
  %v123 = vunpack.c.l.b16 %v52
  %v124 = vunpack.c.l.b16 %v53
  %v125 = vunpack.c.l.b16 %v54
  %v126 = vunpack.c.l.b16 %v55
  %v127 = vunpack.c.l.b16 %v56
  %v128 = vunpack.c.l.b16 %v57
  %v129 = vunpack.c.l.b16 %v58
  %v130 = vunpack.c.l.b16 %v59
  %v131 = vunpack.c.l.b16 %v60
  %v132 = vunpack.c.l.b16 %v61
  %v133 = vunpack.c.l.b16 %v62
  %v134 = vunpack.c.l.b16 %v63
  %v135 = vunpack.c.l.b16 %v64
  %v136 = vunpack.c.l.b16 %v65
  %v137 = vunpack.c.l.b16 %v66
  %v138 = vunpack.c.l.b16 %v67
  %v139 = vunpack.c.l.b16 %v68
  %v140 = vunpack.c.l.b16 %v69
  %v141 = vunpack.c.l.b16 %v70
  %v142 = vunpack.c.l.b16 %v71
  %v143 = vunpack.c.l.b16 %v72
  %v144 = vunpack.c.l.b16 %v73
  %v145 = vunpack.c.l.b16 %v74
  %v146 = vunpack.c.l.b16 %v75
  %v147 = vunpack.c.l.b16 %v76
  %v148 = vunpack.c.l.b16 %v77
  %v149 = vunpack.c.l.b16 %v78
  %v150 = vpack.c.b16 %v119, %v118
  %v151 = vpack.c.b16 %v121, %v120
  %v152 = vpack.c.b16 %v123, %v122
  %v153 = vpack.c.b16 %v125, %v124
  %v154 = vpack.c.b16 %v127, %v126
  %v155 = vpack.c.b16 %v129, %v128
  %v156 = vpack.c.b16 %v131, %v130
  %v157 = vpack.c.b16 %v133, %v132
  %v158 = vpack.c.b16 %v135, %v134
  %v159 = vpack.c.b16 %v137, %v136
  %v160 = vpack.c.b16 %v139, %v138
  %v161 = vpack.c.b16 %v141, %v140
  %v162 = vpack.c.b16 %v143, %v142
  %v163 = vpack.c.b16 %v145, %v144
  %v164 = vpack.c.b16 %v147, %v146
  %v165 = vpack.c.b16 %v149, %v148
  %182 = vmatprep.subr.bf16.mxu0 0
  %183 = vmatpush1.bf16.msra.mxu0 %v157
  %184 = vmatprep.subr.bf16.mxu0 0
  %185 = vmatpush1.bf16.msra.mxu0 %v156
  %186 = vmatprep.subr.bf16.mxu0 0
  %187 = vmatpush1.bf16.msra.mxu0 %v155
  %188 = vmatprep.subr.bf16.mxu0 0
  %189 = vmatpush1.bf16.msra.mxu0 %v154
  %190 = vmatprep.subr.bf16.mxu0 0
  %191 = vmatpush1.bf16.msra.mxu0 %v153
  %192 = vmatprep.subr.bf16.mxu0 0
  %193 = vmatpush1.bf16.msra.mxu0 %v152
  %194 = vmatprep.subr.bf16.mxu0 0
  %195 = vmatpush1.bf16.msra.mxu0 %v151
  %196 = vmatprep.subr.bf16.mxu0 0
  %197 = vmatpush1.bf16.msra.mxu0 %v150
  %198 = vmatprep.subr.bf16.mxu0 0
  %199 = vmatpush2.bf16.msra.mxu0 %v165
  %200 = vmatprep.subr.bf16.mxu0 0
  %201 = vmatpush2.bf16.msra.mxu0 %v164
  %202 = vmatprep.subr.bf16.mxu0 0
  %203 = vmatpush2.bf16.msra.mxu0 %v163
  %204 = vmatprep.subr.bf16.mxu0 0
  %205 = vmatpush2.bf16.msra.mxu0 %v162
  %206 = vmatprep.subr.bf16.mxu0 0
  %207 = vmatpush2.bf16.msra.mxu0 %v161
  %208 = vmatprep.subr.bf16.mxu0 0
  %209 = vmatpush2.bf16.msra.mxu0 %v160
  %210 = vmatprep.subr.bf16.mxu0 0
  %211 = vmatpush2.bf16.msra.mxu0 %v159
  %212 = vmatprep.subr.bf16.mxu0 0
  %213 = vmatpush2.bf16.msra.mxu0 %v158
  %214 = vmatprep.mubr.bf16.mxu0 %v44
  %215 = vmatmul.mubr.bf16.gmra.mxu0 %v43
  %v216 = vpop.f32.mrf.mxu0
  %v217 = vadd.f32 %v84, %v216
  %v218 = vpop.f32.mrf.mxu0
  %v219 = vpop.f32.mrf.mxu0
  %v220 = vadd.f32 %v84, %v219
  %v221 = vpop.f32.mrf.mxu0
  %222 = vmatprep.mubr.bf16.mxu0 %v46
  %223 = vmatmul.mubr.bf16.gmra.mxu0 %v45
  %v224 = vpop.f32.mrf.mxu0
  %v225 = vadd.f32 %v84, %v224
  %v226 = vpop.f32.mrf.mxu0
  %v227 = vpop.f32.mrf.mxu0
  %v228 = vadd.f32 %v84, %v227
  %v229 = vpop.f32.mrf.mxu0
  %230 = vdwg.mxu0
  %v231 = vmax.f32 %v217, 0.0
  %v232 = vmax.f32 %v220, 0.0
  %v233 = vmax.f32 %v225, 0.0
  %v234 = vmax.f32 %v228, 0.0
  %v235 = vpack.c.bf16 %v232, %v231
  %v236 = vpack.c.bf16 %v234, %v233
  %v237 = vld [vmem:[%s2] sm:$0xf]
  %v238 = vld [vmem:[%s2 + $0x4] sm:$0xf]
  %v239 = vld [vmem:[%s2 + $0x8] sm:$0xf]
  %v240 = vld [vmem:[%s2 + $0xc] sm:$0xf]
  %v241 = vld [vmem:[%s2 + $0x10] sm:$0xf]
  %v242 = vld [vmem:[%s2 + $0x14] sm:$0xf]
  %v243 = vld [vmem:[%s2 + $0x18] sm:$0xf]
  %v244 = vld [vmem:[%s2 + $0x1c] sm:$0xf]
  %v245 = vld [vmem:[%s2 + $0x20] sm:$0xf]
  %v246 = vld [vmem:[%s2 + $0x24] sm:$0xf]
  %v247 = vld [vmem:[%s2 + $0x28] sm:$0xf]
  %v248 = vld [vmem:[%s2 + $0x2c] sm:$0xf]
  %v249 = vld [vmem:[%s2 + $0x30] sm:$0xf]
  %v250 = vld [vmem:[%s2 + $0x34] sm:$0xf]
  %v251 = vld [vmem:[%s2 + $0x38] sm:$0xf]
  %v252 = vld [vmem:[%s2 + $0x3c] sm:$0xf]
  %s253 = scalar_lea.vmem %s3, 1
  %v254 = vld [vmem:[%s253] sm:$0x1]
  %v256 = vlaneseq
  %v257 = vshrl.u32 %v256, 7
  %v258 = vsub.s32 0, %v257
  %v259 = vrot.slane %v254, %v258
  %v277 = vunpack.c.l.b16 %v237
  %v278 = vunpack.c.l.b16 %v238
  %v279 = vunpack.c.l.b16 %v239
  %v280 = vunpack.c.l.b16 %v240
  %v281 = vunpack.c.l.b16 %v241
  %v282 = vunpack.c.l.b16 %v242
  %v283 = vunpack.c.l.b16 %v243
  %v284 = vunpack.c.l.b16 %v244
  %v285 = vunpack.c.l.b16 %v245
  %v286 = vunpack.c.l.b16 %v246
  %v287 = vunpack.c.l.b16 %v247
  %v288 = vunpack.c.l.b16 %v248
  %v289 = vunpack.c.l.b16 %v249
  %v290 = vunpack.c.l.b16 %v250
  %v291 = vunpack.c.l.b16 %v251
  %v292 = vunpack.c.l.b16 %v252
  %v293 = vpack.c.b16 %v278, %v277
  %v294 = vpack.c.b16 %v280, %v279
  %v295 = vpack.c.b16 %v282, %v281
  %v296 = vpack.c.b16 %v284, %v283
  %v297 = vpack.c.b16 %v286, %v285
  %v298 = vpack.c.b16 %v288, %v287
  %v299 = vpack.c.b16 %v290, %v289
  %v300 = vpack.c.b16 %v292, %v291
  %309 = vmatprep.subr.bf16.mxu0 0
  %310 = vmatpush1.bf16.msra.mxu0 %v300
  %311 = vmatprep.subr.bf16.mxu0 0
  %312 = vmatpush1.bf16.msra.mxu0 %v299
  %313 = vmatprep.subr.bf16.mxu0 0
  %314 = vmatpush1.bf16.msra.mxu0 %v298
  %315 = vmatprep.subr.bf16.mxu0 0
  %316 = vmatpush1.bf16.msra.mxu0 %v297
  %317 = vmatprep.subr.bf16.mxu0 0
  %318 = vmatpush1.bf16.msra.mxu0 %v296
  %319 = vmatprep.subr.bf16.mxu0 0
  %320 = vmatpush1.bf16.msra.mxu0 %v295
  %321 = vmatprep.subr.bf16.mxu0 0
  %322 = vmatpush1.bf16.msra.mxu0 %v294
  %323 = vmatprep.subr.bf16.mxu0 0
  %324 = vmatpush1.bf16.msra.mxu0 %v293
  %325 = vmatprep.subr.bf16.mxu0 0
  %326 = vmatpush2.bf16.msra.mxu0 0
  %327 = vmatprep.subr.bf16.mxu0 0
  %328 = vmatpush2.bf16.msra.mxu0 0
  %329 = vmatprep.subr.bf16.mxu0 0
  %330 = vmatpush2.bf16.msra.mxu0 0
  %331 = vmatprep.subr.bf16.mxu0 0
  %332 = vmatpush2.bf16.msra.mxu0 0
  %333 = vmatprep.subr.bf16.mxu0 0
  %334 = vmatpush2.bf16.msra.mxu0 0
  %335 = vmatprep.subr.bf16.mxu0 0
  %336 = vmatpush2.bf16.msra.mxu0 0
  %337 = vmatprep.subr.bf16.mxu0 0
  %338 = vmatpush2.bf16.msra.mxu0 0
  %339 = vmatprep.subr.bf16.mxu0 0
  %340 = vmatpush2.bf16.msra.mxu0 0
  %341 = vmatprep.mubr.bf16.mxu0 0
  %342 = vmatmul.mubr.bf16.gmra.mxu0 %v235
  %v343 = vpop.f32.mrf.mxu0
  %v344 = vadd.f32 %v259, %v343
  %v345 = vpop.f32.mrf.mxu0
  %v346 = vpop.f32.mrf.mxu0
  %v347 = vadd.f32 %v259, %v346
  %v348 = vpop.f32.mrf.mxu0
  %349 = vmatprep.mubr.bf16.mxu0 0
  %350 = vmatmul.mubr.bf16.gmra.mxu0 %v236
  %v351 = vpop.f32.mrf.mxu0
  %v352 = vadd.f32 %v259, %v351
  %v353 = vpop.f32.mrf.mxu0
  %v354 = vpop.f32.mrf.mxu0
  %v355 = vadd.f32 %v259, %v354
  %v356 = vpop.f32.mrf.mxu0
  %357 = vdwg.mxu0
  %v358 = vmax.f32 %v344, 0.0
  %v359 = vmax.f32 %v347, 0.0
  %v360 = vmax.f32 %v352, 0.0
  %v361 = vmax.f32 %v355, 0.0
  %v362 = vpack.c.bf16 %v359, %v358
  %v363 = vpack.c.bf16 %v361, %v360
  %s364 = scalar_lea.vmem %s2, 64
  %v365 = vld [vmem:[%s364] sm:$0xf]
  %v366 = vld [vmem:[%s364 + $0x4] sm:$0xf]
  %v367 = vld [vmem:[%s364 + $0x8] sm:$0xf]
  %v368 = vld [vmem:[%s364 + $0xc] sm:$0xf]
  %v369 = vld [vmem:[%s364 + $0x10] sm:$0xf]
  %v370 = vld [vmem:[%s364 + $0x14] sm:$0xf]
  %v371 = vld [vmem:[%s364 + $0x18] sm:$0xf]
  %v372 = vld [vmem:[%s364 + $0x1c] sm:$0xf]
  %v373 = vld [vmem:[%s364 + $0x20] sm:$0xf]
  %v374 = vld [vmem:[%s364 + $0x24] sm:$0xf]
  %v375 = vld [vmem:[%s364 + $0x28] sm:$0xf]
  %v376 = vld [vmem:[%s364 + $0x2c] sm:$0xf]
  %v377 = vld [vmem:[%s364 + $0x30] sm:$0xf]
  %v378 = vld [vmem:[%s364 + $0x34] sm:$0xf]
  %v379 = vld [vmem:[%s364 + $0x38] sm:$0xf]
  %v380 = vld [vmem:[%s364 + $0x3c] sm:$0xf]
  %s381 = scalar_lea.vmem %s3, 2
  %v382 = vld [vmem:[%s381] sm:$0x1]
  %v384 = vlaneseq
  %v385 = vshrl.u32 %v384, 7
  %v386 = vsub.s32 0, %v385
  %v387 = vrot.slane %v382, %v386
  %v405 = vunpack.c.l.b16 %v365
  %v406 = vunpack.c.l.b16 %v366
  %v407 = vunpack.c.l.b16 %v367
  %v408 = vunpack.c.l.b16 %v368
  %v409 = vunpack.c.l.b16 %v369
  %v410 = vunpack.c.l.b16 %v370
  %v411 = vunpack.c.l.b16 %v371
  %v412 = vunpack.c.l.b16 %v372
  %v413 = vunpack.c.l.b16 %v373
  %v414 = vunpack.c.l.b16 %v374
  %v415 = vunpack.c.l.b16 %v375
  %v416 = vunpack.c.l.b16 %v376
  %v417 = vunpack.c.l.b16 %v377
  %v418 = vunpack.c.l.b16 %v378
  %v419 = vunpack.c.l.b16 %v379
  %v420 = vunpack.c.l.b16 %v380
  %v421 = vpack.c.b16 %v406, %v405
  %v422 = vpack.c.b16 %v408, %v407
  %v423 = vpack.c.b16 %v410, %v409
  %v424 = vpack.c.b16 %v412, %v411
  %v425 = vpack.c.b16 %v414, %v413
  %v426 = vpack.c.b16 %v416, %v415
  %v427 = vpack.c.b16 %v418, %v417
  %v428 = vpack.c.b16 %v420, %v419
  %437 = vmatprep.subr.bf16.mxu0 0
  %438 = vmatpush1.bf16.msra.mxu0 %v428
  %439 = vmatprep.subr.bf16.mxu0 0
  %440 = vmatpush1.bf16.msra.mxu0 %v427
  %441 = vmatprep.subr.bf16.mxu0 0
  %442 = vmatpush1.bf16.msra.mxu0 %v426
  %443 = vmatprep.subr.bf16.mxu0 0
  %444 = vmatpush1.bf16.msra.mxu0 %v425
  %445 = vmatprep.subr.bf16.mxu0 0
  %446 = vmatpush1.bf16.msra.mxu0 %v424
  %447 = vmatprep.subr.bf16.mxu0 0
  %448 = vmatpush1.bf16.msra.mxu0 %v423
  %449 = vmatprep.subr.bf16.mxu0 0
  %450 = vmatpush1.bf16.msra.mxu0 %v422
  %451 = vmatprep.subr.bf16.mxu0 0
  %452 = vmatpush1.bf16.msra.mxu0 %v421
  %453 = vmatprep.subr.bf16.mxu0 0
  %454 = vmatpush2.bf16.msra.mxu0 0
  %455 = vmatprep.subr.bf16.mxu0 0
  %456 = vmatpush2.bf16.msra.mxu0 0
  %457 = vmatprep.subr.bf16.mxu0 0
  %458 = vmatpush2.bf16.msra.mxu0 0
  %459 = vmatprep.subr.bf16.mxu0 0
  %460 = vmatpush2.bf16.msra.mxu0 0
  %461 = vmatprep.subr.bf16.mxu0 0
  %462 = vmatpush2.bf16.msra.mxu0 0
  %463 = vmatprep.subr.bf16.mxu0 0
  %464 = vmatpush2.bf16.msra.mxu0 0
  %465 = vmatprep.subr.bf16.mxu0 0
  %466 = vmatpush2.bf16.msra.mxu0 0
  %467 = vmatprep.subr.bf16.mxu0 0
  %468 = vmatpush2.bf16.msra.mxu0 0
  %469 = vmatprep.mubr.bf16.mxu0 0
  %470 = vmatmul.mubr.bf16.gmra.mxu0 %v362
  %v471 = vpop.f32.mrf.mxu0
  %v472 = vadd.f32 %v387, %v471
  %v473 = vpop.f32.mrf.mxu0
  %v474 = vpop.f32.mrf.mxu0
  %v475 = vadd.f32 %v387, %v474
  %v476 = vpop.f32.mrf.mxu0
  %477 = vmatprep.mubr.bf16.mxu0 0
  %478 = vmatmul.mubr.bf16.gmra.mxu0 %v363
  %v479 = vpop.f32.mrf.mxu0
  %v480 = vadd.f32 %v387, %v479
  %v481 = vpop.f32.mrf.mxu0
  %v482 = vpop.f32.mrf.mxu0
  %v483 = vadd.f32 %v387, %v482
  %v484 = vpop.f32.mrf.mxu0
  %485 = vdwg.mxu0
  %v486 = vmax.f32 %v472, 0.0
  %v487 = vmax.f32 %v475, 0.0
  %v488 = vmax.f32 %v480, 0.0
  %v489 = vmax.f32 %v483, 0.0
  %v490 = vpack.c.bf16 %v487, %v486
  %v491 = vpack.c.bf16 %v489, %v488
  %s492 = scalar_lea.vmem %s2, 128
  %v493 = vld [vmem:[%s492] sm:$0xf]
  %v494 = vld [vmem:[%s492 + $0x4] sm:$0xf]
  %v495 = vld [vmem:[%s492 + $0x8] sm:$0xf]
  %v496 = vld [vmem:[%s492 + $0xc] sm:$0xf]
  %v497 = vld [vmem:[%s492 + $0x10] sm:$0xf]
  %v498 = vld [vmem:[%s492 + $0x14] sm:$0xf]
  %v499 = vld [vmem:[%s492 + $0x18] sm:$0xf]
  %v500 = vld [vmem:[%s492 + $0x1c] sm:$0xf]
  %v501 = vld [vmem:[%s492 + $0x20] sm:$0xf]
  %v502 = vld [vmem:[%s492 + $0x24] sm:$0xf]
  %v503 = vld [vmem:[%s492 + $0x28] sm:$0xf]
  %v504 = vld [vmem:[%s492 + $0x2c] sm:$0xf]
  %v505 = vld [vmem:[%s492 + $0x30] sm:$0xf]
  %v506 = vld [vmem:[%s492 + $0x34] sm:$0xf]
  %v507 = vld [vmem:[%s492 + $0x38] sm:$0xf]
  %v508 = vld [vmem:[%s492 + $0x3c] sm:$0xf]
  %s509 = scalar_lea.vmem %s3, 3
  %v510 = vld [vmem:[%s509] sm:$0x1]
  %v512 = vlaneseq
  %v513 = vshrl.u32 %v512, 7
  %v514 = vsub.s32 0, %v513
  %v515 = vrot.slane %v510, %v514
  %v533 = vunpack.c.l.b16 %v493
  %v534 = vunpack.c.l.b16 %v494
  %v535 = vunpack.c.l.b16 %v495
  %v536 = vunpack.c.l.b16 %v496
  %v537 = vunpack.c.l.b16 %v497
  %v538 = vunpack.c.l.b16 %v498
  %v539 = vunpack.c.l.b16 %v499
  %v540 = vunpack.c.l.b16 %v500
  %v541 = vunpack.c.l.b16 %v501
  %v542 = vunpack.c.l.b16 %v502
  %v543 = vunpack.c.l.b16 %v503
  %v544 = vunpack.c.l.b16 %v504
  %v545 = vunpack.c.l.b16 %v505
  %v546 = vunpack.c.l.b16 %v506
  %v547 = vunpack.c.l.b16 %v507
  %v548 = vunpack.c.l.b16 %v508
  %v549 = vpack.c.b16 %v534, %v533
  %v550 = vpack.c.b16 %v536, %v535
  %v551 = vpack.c.b16 %v538, %v537
  %v552 = vpack.c.b16 %v540, %v539
  %v553 = vpack.c.b16 %v542, %v541
  %v554 = vpack.c.b16 %v544, %v543
  %v555 = vpack.c.b16 %v546, %v545
  %v556 = vpack.c.b16 %v548, %v547
  %565 = vmatprep.subr.bf16.mxu0 0
  %566 = vmatpush1.bf16.msra.mxu0 %v556
  %567 = vmatprep.subr.bf16.mxu0 0
  %568 = vmatpush1.bf16.msra.mxu0 %v555
  %569 = vmatprep.subr.bf16.mxu0 0
  %570 = vmatpush1.bf16.msra.mxu0 %v554
  %571 = vmatprep.subr.bf16.mxu0 0
  %572 = vmatpush1.bf16.msra.mxu0 %v553
  %573 = vmatprep.subr.bf16.mxu0 0
  %574 = vmatpush1.bf16.msra.mxu0 %v552
  %575 = vmatprep.subr.bf16.mxu0 0
  %576 = vmatpush1.bf16.msra.mxu0 %v551
  %577 = vmatprep.subr.bf16.mxu0 0
  %578 = vmatpush1.bf16.msra.mxu0 %v550
  %579 = vmatprep.subr.bf16.mxu0 0
  %580 = vmatpush1.bf16.msra.mxu0 %v549
  %581 = vmatprep.subr.bf16.mxu0 0
  %582 = vmatpush2.bf16.msra.mxu0 0
  %583 = vmatprep.subr.bf16.mxu0 0
  %584 = vmatpush2.bf16.msra.mxu0 0
  %585 = vmatprep.subr.bf16.mxu0 0
  %586 = vmatpush2.bf16.msra.mxu0 0
  %587 = vmatprep.subr.bf16.mxu0 0
  %588 = vmatpush2.bf16.msra.mxu0 0
  %589 = vmatprep.subr.bf16.mxu0 0
  %590 = vmatpush2.bf16.msra.mxu0 0
  %591 = vmatprep.subr.bf16.mxu0 0
  %592 = vmatpush2.bf16.msra.mxu0 0
  %593 = vmatprep.subr.bf16.mxu0 0
  %594 = vmatpush2.bf16.msra.mxu0 0
  %595 = vmatprep.subr.bf16.mxu0 0
  %596 = vmatpush2.bf16.msra.mxu0 0
  %597 = vmatprep.mubr.bf16.mxu0 0
  %598 = vmatmul.mubr.bf16.gmra.mxu0 %v490
  %v599 = vpop.f32.mrf.mxu0
  %v600 = vadd.f32 %v515, %v599
  %v601 = vpop.f32.mrf.mxu0
  %v602 = vpop.f32.mrf.mxu0
  %v603 = vadd.f32 %v515, %v602
  %v604 = vpop.f32.mrf.mxu0
  %605 = vmatprep.mubr.bf16.mxu0 0
  %606 = vmatmul.mubr.bf16.gmra.mxu0 %v491
  %v607 = vpop.f32.mrf.mxu0
  %v608 = vadd.f32 %v515, %v607
  %v609 = vpop.f32.mrf.mxu0
  %v610 = vpop.f32.mrf.mxu0
  %v611 = vadd.f32 %v515, %v610
  %v612 = vpop.f32.mrf.mxu0
  %613 = vdwg.mxu0
  %v614 = vmax.f32 %v600, 0.0
  %v615 = vmax.f32 %v603, 0.0
  %v616 = vmax.f32 %v608, 0.0
  %v617 = vmax.f32 %v611, 0.0
  %v618 = vld [vmem:[%s4] sm:$0x1]
  %v620 = vlaneseq
  %v621 = vshrl.u32 %v620, 7
  %v622 = vsub.s32 0, %v621
  %v623 = vrot.slane %v618, %v622
  %v625 = vmul.f32 %v614, %v623
  %v626 = vmul.f32 %v615, %v623
  %v627 = vmul.f32 %v616, %v623
  %v628 = vmul.f32 %v617, %v623
  %629 = vadd.xlane.f32.xlu0 %v625
  %v630 = vpop.xlane.xlu0 %629
  %631 = vadd.xlane.f32.xlu0 %v626
  %v632 = vpop.xlane.xlu0 %631
  %633 = vadd.xlane.f32.xlu0 %v627
  %v634 = vpop.xlane.xlu0 %633
  %635 = vadd.xlane.f32.xlu0 %v628
  %v636 = vpop.xlane.xlu0 %635
  %vm637 = vcmask 7168
  %638 = vst.msk [vmem:[%s9] sm:$0xff] %vm637, %v630
  %639 = vst.msk [vmem:[%s9 + $0x8] sm:$0xff] %vm637, %v632
  %640 = vst.msk [vmem:[%s9 + $0x10] sm:$0xff] %vm637, %v634
  %641 = vst.msk [vmem:[%s9 + $0x18] sm:$0xff] %vm637, %v636
  %v642 = vld [vmem:[%s5] sm:$0xf]
  %v643 = vld [vmem:[%s5 + $0x4] sm:$0xf]
  %v644 = vld [vmem:[%s5 + $0x8] sm:$0xf]
  %v645 = vld [vmem:[%s5 + $0xc] sm:$0xf]
  %v646 = vld [vmem:[%s5 + $0x10] sm:$0xf]
  %v647 = vld [vmem:[%s5 + $0x14] sm:$0xf]
  %v648 = vld [vmem:[%s5 + $0x18] sm:$0xf]
  %v649 = vld [vmem:[%s5 + $0x1c] sm:$0xf]
  %v650 = vld [vmem:[%s5 + $0x20] sm:$0xf]
  %v651 = vld [vmem:[%s5 + $0x24] sm:$0xf]
  %v652 = vld [vmem:[%s5 + $0x28] sm:$0xf]
  %v653 = vld [vmem:[%s5 + $0x2c] sm:$0xf]
  %v654 = vld [vmem:[%s5 + $0x30] sm:$0xf]
  %v655 = vld [vmem:[%s5 + $0x34] sm:$0xf]
  %v656 = vld [vmem:[%s5 + $0x38] sm:$0xf]
  %v657 = vld [vmem:[%s5 + $0x3c] sm:$0xf]
  %v658 = vld [vmem:[%s5 + $0x40] sm:$0xf]
  %v659 = vld [vmem:[%s5 + $0x44] sm:$0xf]
  %v660 = vld [vmem:[%s5 + $0x48] sm:$0xf]
  %v661 = vld [vmem:[%s5 + $0x4c] sm:$0xf]
  %v662 = vld [vmem:[%s5 + $0x50] sm:$0xf]
  %v663 = vld [vmem:[%s5 + $0x54] sm:$0xf]
  %v664 = vld [vmem:[%s5 + $0x58] sm:$0xf]
  %v665 = vld [vmem:[%s5 + $0x5c] sm:$0xf]
  %v666 = vld [vmem:[%s5 + $0x60] sm:$0xf]
  %v667 = vld [vmem:[%s5 + $0x64] sm:$0xf]
  %v668 = vld [vmem:[%s5 + $0x68] sm:$0xf]
  %v669 = vld [vmem:[%s5 + $0x6c] sm:$0xf]
  %v670 = vld [vmem:[%s5 + $0x70] sm:$0xf]
  %v671 = vld [vmem:[%s5 + $0x74] sm:$0xf]
  %v672 = vld [vmem:[%s5 + $0x78] sm:$0xf]
  %v673 = vld [vmem:[%s5 + $0x7c] sm:$0xf]
  %v674 = vld [vmem:[%s7] sm:$0x1]
  %v676 = vlaneseq
  %v677 = vshrl.u32 %v676, 7
  %v678 = vsub.s32 0, %v677
  %v679 = vrot.slane %v674, %v678
  %v713 = vunpack.c.l.b16 %v642
  %v714 = vunpack.c.l.b16 %v643
  %v715 = vunpack.c.l.b16 %v644
  %v716 = vunpack.c.l.b16 %v645
  %v717 = vunpack.c.l.b16 %v646
  %v718 = vunpack.c.l.b16 %v647
  %v719 = vunpack.c.l.b16 %v648
  %v720 = vunpack.c.l.b16 %v649
  %v721 = vunpack.c.l.b16 %v650
  %v722 = vunpack.c.l.b16 %v651
  %v723 = vunpack.c.l.b16 %v652
  %v724 = vunpack.c.l.b16 %v653
  %v725 = vunpack.c.l.b16 %v654
  %v726 = vunpack.c.l.b16 %v655
  %v727 = vunpack.c.l.b16 %v656
  %v728 = vunpack.c.l.b16 %v657
  %v729 = vunpack.c.l.b16 %v658
  %v730 = vunpack.c.l.b16 %v659
  %v731 = vunpack.c.l.b16 %v660
  %v732 = vunpack.c.l.b16 %v661
  %v733 = vunpack.c.l.b16 %v662
  %v734 = vunpack.c.l.b16 %v663
  %v735 = vunpack.c.l.b16 %v664
  %v736 = vunpack.c.l.b16 %v665
  %v737 = vunpack.c.l.b16 %v666
  %v738 = vunpack.c.l.b16 %v667
  %v739 = vunpack.c.l.b16 %v668
  %v740 = vunpack.c.l.b16 %v669
  %v741 = vunpack.c.l.b16 %v670
  %v742 = vunpack.c.l.b16 %v671
  %v743 = vunpack.c.l.b16 %v672
  %v744 = vunpack.c.l.b16 %v673
  %v745 = vpack.c.b16 %v714, %v713
  %v746 = vpack.c.b16 %v716, %v715
  %v747 = vpack.c.b16 %v718, %v717
  %v748 = vpack.c.b16 %v720, %v719
  %v749 = vpack.c.b16 %v722, %v721
  %v750 = vpack.c.b16 %v724, %v723
  %v751 = vpack.c.b16 %v726, %v725
  %v752 = vpack.c.b16 %v728, %v727
  %v753 = vpack.c.b16 %v730, %v729
  %v754 = vpack.c.b16 %v732, %v731
  %v755 = vpack.c.b16 %v734, %v733
  %v756 = vpack.c.b16 %v736, %v735
  %v757 = vpack.c.b16 %v738, %v737
  %v758 = vpack.c.b16 %v740, %v739
  %v759 = vpack.c.b16 %v742, %v741
  %v760 = vpack.c.b16 %v744, %v743
  %777 = vmatprep.subr.bf16.mxu0 0
  %778 = vmatpush1.bf16.msra.mxu0 %v752
  %779 = vmatprep.subr.bf16.mxu0 0
  %780 = vmatpush1.bf16.msra.mxu0 %v751
  %781 = vmatprep.subr.bf16.mxu0 0
  %782 = vmatpush1.bf16.msra.mxu0 %v750
  %783 = vmatprep.subr.bf16.mxu0 0
  %784 = vmatpush1.bf16.msra.mxu0 %v749
  %785 = vmatprep.subr.bf16.mxu0 0
  %786 = vmatpush1.bf16.msra.mxu0 %v748
  %787 = vmatprep.subr.bf16.mxu0 0
  %788 = vmatpush1.bf16.msra.mxu0 %v747
  %789 = vmatprep.subr.bf16.mxu0 0
  %790 = vmatpush1.bf16.msra.mxu0 %v746
  %791 = vmatprep.subr.bf16.mxu0 0
  %792 = vmatpush1.bf16.msra.mxu0 %v745
  %793 = vmatprep.subr.bf16.mxu0 0
  %794 = vmatpush2.bf16.msra.mxu0 %v760
  %795 = vmatprep.subr.bf16.mxu0 0
  %796 = vmatpush2.bf16.msra.mxu0 %v759
  %797 = vmatprep.subr.bf16.mxu0 0
  %798 = vmatpush2.bf16.msra.mxu0 %v758
  %799 = vmatprep.subr.bf16.mxu0 0
  %800 = vmatpush2.bf16.msra.mxu0 %v757
  %801 = vmatprep.subr.bf16.mxu0 0
  %802 = vmatpush2.bf16.msra.mxu0 %v756
  %803 = vmatprep.subr.bf16.mxu0 0
  %804 = vmatpush2.bf16.msra.mxu0 %v755
  %805 = vmatprep.subr.bf16.mxu0 0
  %806 = vmatpush2.bf16.msra.mxu0 %v754
  %807 = vmatprep.subr.bf16.mxu0 0
  %808 = vmatpush2.bf16.msra.mxu0 %v753
  %809 = vmatprep.mubr.bf16.mxu0 %v44
  %810 = vmatmul.mubr.bf16.gmra.mxu0 %v43
  %v811 = vpop.f32.mrf.mxu0
  %v812 = vadd.f32 %v679, %v811
  %v813 = vpop.f32.mrf.mxu0
  %v814 = vpop.f32.mrf.mxu0
  %v815 = vadd.f32 %v679, %v814
  %v816 = vpop.f32.mrf.mxu0
  %817 = vmatprep.mubr.bf16.mxu0 %v46
  %818 = vmatmul.mubr.bf16.gmra.mxu0 %v45
  %v819 = vpop.f32.mrf.mxu0
  %v820 = vadd.f32 %v679, %v819
  %v821 = vpop.f32.mrf.mxu0
  %v822 = vpop.f32.mrf.mxu0
  %v823 = vadd.f32 %v679, %v822
  %v824 = vpop.f32.mrf.mxu0
  %825 = vdwg.mxu0
  %v826 = vmax.f32 %v812, 0.0
  %v827 = vmax.f32 %v815, 0.0
  %v828 = vmax.f32 %v820, 0.0
  %v829 = vmax.f32 %v823, 0.0
  %v830 = vpack.c.bf16 %v827, %v826
  %v831 = vpack.c.bf16 %v829, %v828
  %v832 = vld [vmem:[%s6] sm:$0xf]
  %v833 = vld [vmem:[%s6 + $0x4] sm:$0xf]
  %v834 = vld [vmem:[%s6 + $0x8] sm:$0xf]
  %v835 = vld [vmem:[%s6 + $0xc] sm:$0xf]
  %v836 = vld [vmem:[%s6 + $0x10] sm:$0xf]
  %v837 = vld [vmem:[%s6 + $0x14] sm:$0xf]
  %v838 = vld [vmem:[%s6 + $0x18] sm:$0xf]
  %v839 = vld [vmem:[%s6 + $0x1c] sm:$0xf]
  %v840 = vld [vmem:[%s6 + $0x20] sm:$0xf]
  %v841 = vld [vmem:[%s6 + $0x24] sm:$0xf]
  %v842 = vld [vmem:[%s6 + $0x28] sm:$0xf]
  %v843 = vld [vmem:[%s6 + $0x2c] sm:$0xf]
  %v844 = vld [vmem:[%s6 + $0x30] sm:$0xf]
  %v845 = vld [vmem:[%s6 + $0x34] sm:$0xf]
  %v846 = vld [vmem:[%s6 + $0x38] sm:$0xf]
  %v847 = vld [vmem:[%s6 + $0x3c] sm:$0xf]
  %s848 = scalar_lea.vmem %s7, 1
  %v849 = vld [vmem:[%s848] sm:$0x1]
  %v851 = vlaneseq
  %v852 = vshrl.u32 %v851, 7
  %v853 = vsub.s32 0, %v852
  %v854 = vrot.slane %v849, %v853
  %v872 = vunpack.c.l.b16 %v832
  %v873 = vunpack.c.l.b16 %v833
  %v874 = vunpack.c.l.b16 %v834
  %v875 = vunpack.c.l.b16 %v835
  %v876 = vunpack.c.l.b16 %v836
  %v877 = vunpack.c.l.b16 %v837
  %v878 = vunpack.c.l.b16 %v838
  %v879 = vunpack.c.l.b16 %v839
  %v880 = vunpack.c.l.b16 %v840
  %v881 = vunpack.c.l.b16 %v841
  %v882 = vunpack.c.l.b16 %v842
  %v883 = vunpack.c.l.b16 %v843
  %v884 = vunpack.c.l.b16 %v844
  %v885 = vunpack.c.l.b16 %v845
  %v886 = vunpack.c.l.b16 %v846
  %v887 = vunpack.c.l.b16 %v847
  %v888 = vpack.c.b16 %v873, %v872
  %v889 = vpack.c.b16 %v875, %v874
  %v890 = vpack.c.b16 %v877, %v876
  %v891 = vpack.c.b16 %v879, %v878
  %v892 = vpack.c.b16 %v881, %v880
  %v893 = vpack.c.b16 %v883, %v882
  %v894 = vpack.c.b16 %v885, %v884
  %v895 = vpack.c.b16 %v887, %v886
  %904 = vmatprep.subr.bf16.mxu0 0
  %905 = vmatpush1.bf16.msra.mxu0 %v895
  %906 = vmatprep.subr.bf16.mxu0 0
  %907 = vmatpush1.bf16.msra.mxu0 %v894
  %908 = vmatprep.subr.bf16.mxu0 0
  %909 = vmatpush1.bf16.msra.mxu0 %v893
  %910 = vmatprep.subr.bf16.mxu0 0
  %911 = vmatpush1.bf16.msra.mxu0 %v892
  %912 = vmatprep.subr.bf16.mxu0 0
  %913 = vmatpush1.bf16.msra.mxu0 %v891
  %914 = vmatprep.subr.bf16.mxu0 0
  %915 = vmatpush1.bf16.msra.mxu0 %v890
  %916 = vmatprep.subr.bf16.mxu0 0
  %917 = vmatpush1.bf16.msra.mxu0 %v889
  %918 = vmatprep.subr.bf16.mxu0 0
  %919 = vmatpush1.bf16.msra.mxu0 %v888
  %920 = vmatprep.subr.bf16.mxu0 0
  %921 = vmatpush2.bf16.msra.mxu0 0
  %922 = vmatprep.subr.bf16.mxu0 0
  %923 = vmatpush2.bf16.msra.mxu0 0
  %924 = vmatprep.subr.bf16.mxu0 0
  %925 = vmatpush2.bf16.msra.mxu0 0
  %926 = vmatprep.subr.bf16.mxu0 0
  %927 = vmatpush2.bf16.msra.mxu0 0
  %928 = vmatprep.subr.bf16.mxu0 0
  %929 = vmatpush2.bf16.msra.mxu0 0
  %930 = vmatprep.subr.bf16.mxu0 0
  %931 = vmatpush2.bf16.msra.mxu0 0
  %932 = vmatprep.subr.bf16.mxu0 0
  %933 = vmatpush2.bf16.msra.mxu0 0
  %934 = vmatprep.subr.bf16.mxu0 0
  %935 = vmatpush2.bf16.msra.mxu0 0
  %936 = vmatprep.mubr.bf16.mxu0 0
  %937 = vmatmul.mubr.bf16.gmra.mxu0 %v830
  %v938 = vpop.f32.mrf.mxu0
  %v939 = vadd.f32 %v854, %v938
  %v940 = vpop.f32.mrf.mxu0
  %v941 = vpop.f32.mrf.mxu0
  %v942 = vadd.f32 %v854, %v941
  %v943 = vpop.f32.mrf.mxu0
  %944 = vmatprep.mubr.bf16.mxu0 0
  %945 = vmatmul.mubr.bf16.gmra.mxu0 %v831
  %v946 = vpop.f32.mrf.mxu0
  %v947 = vadd.f32 %v854, %v946
  %v948 = vpop.f32.mrf.mxu0
  %v949 = vpop.f32.mrf.mxu0
  %v950 = vadd.f32 %v854, %v949
  %v951 = vpop.f32.mrf.mxu0
  %952 = vdwg.mxu0
  %v953 = vmax.f32 %v939, 0.0
  %v954 = vmax.f32 %v942, 0.0
  %v955 = vmax.f32 %v947, 0.0
  %v956 = vmax.f32 %v950, 0.0
  %v957 = vpack.c.bf16 %v954, %v953
  %v958 = vpack.c.bf16 %v956, %v955
  %s959 = scalar_lea.vmem %s6, 64
  %v960 = vld [vmem:[%s959] sm:$0xf]
  %v961 = vld [vmem:[%s959 + $0x4] sm:$0xf]
  %v962 = vld [vmem:[%s959 + $0x8] sm:$0xf]
  %v963 = vld [vmem:[%s959 + $0xc] sm:$0xf]
  %v964 = vld [vmem:[%s959 + $0x10] sm:$0xf]
  %v965 = vld [vmem:[%s959 + $0x14] sm:$0xf]
  %v966 = vld [vmem:[%s959 + $0x18] sm:$0xf]
  %v967 = vld [vmem:[%s959 + $0x1c] sm:$0xf]
  %v968 = vld [vmem:[%s959 + $0x20] sm:$0xf]
  %v969 = vld [vmem:[%s959 + $0x24] sm:$0xf]
  %v970 = vld [vmem:[%s959 + $0x28] sm:$0xf]
  %v971 = vld [vmem:[%s959 + $0x2c] sm:$0xf]
  %v972 = vld [vmem:[%s959 + $0x30] sm:$0xf]
  %v973 = vld [vmem:[%s959 + $0x34] sm:$0xf]
  %v974 = vld [vmem:[%s959 + $0x38] sm:$0xf]
  %v975 = vld [vmem:[%s959 + $0x3c] sm:$0xf]
  %s976 = scalar_lea.vmem %s7, 2
  %v977 = vld [vmem:[%s976] sm:$0x1]
  %v979 = vlaneseq
  %v980 = vshrl.u32 %v979, 7
  %v981 = vsub.s32 0, %v980
  %v982 = vrot.slane %v977, %v981
  %v1000 = vunpack.c.l.b16 %v960
  %v1001 = vunpack.c.l.b16 %v961
  %v1002 = vunpack.c.l.b16 %v962
  %v1003 = vunpack.c.l.b16 %v963
  %v1004 = vunpack.c.l.b16 %v964
  %v1005 = vunpack.c.l.b16 %v965
  %v1006 = vunpack.c.l.b16 %v966
  %v1007 = vunpack.c.l.b16 %v967
  %v1008 = vunpack.c.l.b16 %v968
  %v1009 = vunpack.c.l.b16 %v969
  %v1010 = vunpack.c.l.b16 %v970
  %v1011 = vunpack.c.l.b16 %v971
  %v1012 = vunpack.c.l.b16 %v972
  %v1013 = vunpack.c.l.b16 %v973
  %v1014 = vunpack.c.l.b16 %v974
  %v1015 = vunpack.c.l.b16 %v975
  %v1016 = vpack.c.b16 %v1001, %v1000
  %v1017 = vpack.c.b16 %v1003, %v1002
  %v1018 = vpack.c.b16 %v1005, %v1004
  %v1019 = vpack.c.b16 %v1007, %v1006
  %v1020 = vpack.c.b16 %v1009, %v1008
  %v1021 = vpack.c.b16 %v1011, %v1010
  %v1022 = vpack.c.b16 %v1013, %v1012
  %v1023 = vpack.c.b16 %v1015, %v1014
  %1032 = vmatprep.subr.bf16.mxu0 0
  %1033 = vmatpush1.bf16.msra.mxu0 %v1023
  %1034 = vmatprep.subr.bf16.mxu0 0
  %1035 = vmatpush1.bf16.msra.mxu0 %v1022
  %1036 = vmatprep.subr.bf16.mxu0 0
  %1037 = vmatpush1.bf16.msra.mxu0 %v1021
  %1038 = vmatprep.subr.bf16.mxu0 0
  %1039 = vmatpush1.bf16.msra.mxu0 %v1020
  %1040 = vmatprep.subr.bf16.mxu0 0
  %1041 = vmatpush1.bf16.msra.mxu0 %v1019
  %1042 = vmatprep.subr.bf16.mxu0 0
  %1043 = vmatpush1.bf16.msra.mxu0 %v1018
  %1044 = vmatprep.subr.bf16.mxu0 0
  %1045 = vmatpush1.bf16.msra.mxu0 %v1017
  %1046 = vmatprep.subr.bf16.mxu0 0
  %1047 = vmatpush1.bf16.msra.mxu0 %v1016
  %1048 = vmatprep.subr.bf16.mxu0 0
  %1049 = vmatpush2.bf16.msra.mxu0 0
  %1050 = vmatprep.subr.bf16.mxu0 0
  %1051 = vmatpush2.bf16.msra.mxu0 0
  %1052 = vmatprep.subr.bf16.mxu0 0
  %1053 = vmatpush2.bf16.msra.mxu0 0
  %1054 = vmatprep.subr.bf16.mxu0 0
  %1055 = vmatpush2.bf16.msra.mxu0 0
  %1056 = vmatprep.subr.bf16.mxu0 0
  %1057 = vmatpush2.bf16.msra.mxu0 0
  %1058 = vmatprep.subr.bf16.mxu0 0
  %1059 = vmatpush2.bf16.msra.mxu0 0
  %1060 = vmatprep.subr.bf16.mxu0 0
  %1061 = vmatpush2.bf16.msra.mxu0 0
  %1062 = vmatprep.subr.bf16.mxu0 0
  %1063 = vmatpush2.bf16.msra.mxu0 0
  %1064 = vmatprep.mubr.bf16.mxu0 0
  %1065 = vmatmul.mubr.bf16.gmra.mxu0 %v957
  %v1066 = vpop.f32.mrf.mxu0
  %v1067 = vadd.f32 %v982, %v1066
  %v1068 = vpop.f32.mrf.mxu0
  %v1069 = vpop.f32.mrf.mxu0
  %v1070 = vadd.f32 %v982, %v1069
  %v1071 = vpop.f32.mrf.mxu0
  %1072 = vmatprep.mubr.bf16.mxu0 0
  %1073 = vmatmul.mubr.bf16.gmra.mxu0 %v958
  %v1074 = vpop.f32.mrf.mxu0
  %v1075 = vadd.f32 %v982, %v1074
  %v1076 = vpop.f32.mrf.mxu0
  %v1077 = vpop.f32.mrf.mxu0
  %v1078 = vadd.f32 %v982, %v1077
  %v1079 = vpop.f32.mrf.mxu0
  %1080 = vdwg.mxu0
  %v1081 = vmax.f32 %v1067, 0.0
  %v1082 = vmax.f32 %v1070, 0.0
  %v1083 = vmax.f32 %v1075, 0.0
  %v1084 = vmax.f32 %v1078, 0.0
  %v1085 = vpack.c.bf16 %v1082, %v1081
  %v1086 = vpack.c.bf16 %v1084, %v1083
  %s1087 = scalar_lea.vmem %s6, 128
  %v1088 = vld [vmem:[%s1087] sm:$0xf]
  %v1089 = vld [vmem:[%s1087 + $0x4] sm:$0xf]
  %v1090 = vld [vmem:[%s1087 + $0x8] sm:$0xf]
  %v1091 = vld [vmem:[%s1087 + $0xc] sm:$0xf]
  %v1092 = vld [vmem:[%s1087 + $0x10] sm:$0xf]
  %v1093 = vld [vmem:[%s1087 + $0x14] sm:$0xf]
  %v1094 = vld [vmem:[%s1087 + $0x18] sm:$0xf]
  %v1095 = vld [vmem:[%s1087 + $0x1c] sm:$0xf]
  %v1096 = vld [vmem:[%s1087 + $0x20] sm:$0xf]
  %v1097 = vld [vmem:[%s1087 + $0x24] sm:$0xf]
  %v1098 = vld [vmem:[%s1087 + $0x28] sm:$0xf]
  %v1099 = vld [vmem:[%s1087 + $0x2c] sm:$0xf]
  %v1100 = vld [vmem:[%s1087 + $0x30] sm:$0xf]
  %v1101 = vld [vmem:[%s1087 + $0x34] sm:$0xf]
  %v1102 = vld [vmem:[%s1087 + $0x38] sm:$0xf]
  %v1103 = vld [vmem:[%s1087 + $0x3c] sm:$0xf]
  %s1104 = scalar_lea.vmem %s7, 3
  %v1105 = vld [vmem:[%s1104] sm:$0x1]
  %v1107 = vlaneseq
  %v1108 = vshrl.u32 %v1107, 7
  %v1109 = vsub.s32 0, %v1108
  %v1110 = vrot.slane %v1105, %v1109
  %v1128 = vunpack.c.l.b16 %v1088
  %v1129 = vunpack.c.l.b16 %v1089
  %v1130 = vunpack.c.l.b16 %v1090
  %v1131 = vunpack.c.l.b16 %v1091
  %v1132 = vunpack.c.l.b16 %v1092
  %v1133 = vunpack.c.l.b16 %v1093
  %v1134 = vunpack.c.l.b16 %v1094
  %v1135 = vunpack.c.l.b16 %v1095
  %v1136 = vunpack.c.l.b16 %v1096
  %v1137 = vunpack.c.l.b16 %v1097
  %v1138 = vunpack.c.l.b16 %v1098
  %v1139 = vunpack.c.l.b16 %v1099
  %v1140 = vunpack.c.l.b16 %v1100
  %v1141 = vunpack.c.l.b16 %v1101
  %v1142 = vunpack.c.l.b16 %v1102
  %v1143 = vunpack.c.l.b16 %v1103
  %v1144 = vpack.c.b16 %v1129, %v1128
  %v1145 = vpack.c.b16 %v1131, %v1130
  %v1146 = vpack.c.b16 %v1133, %v1132
  %v1147 = vpack.c.b16 %v1135, %v1134
  %v1148 = vpack.c.b16 %v1137, %v1136
  %v1149 = vpack.c.b16 %v1139, %v1138
  %v1150 = vpack.c.b16 %v1141, %v1140
  %v1151 = vpack.c.b16 %v1143, %v1142
  %1160 = vmatprep.subr.bf16.mxu0 0
  %1161 = vmatpush1.bf16.msra.mxu0 %v1151
  %1162 = vmatprep.subr.bf16.mxu0 0
  %1163 = vmatpush1.bf16.msra.mxu0 %v1150
  %1164 = vmatprep.subr.bf16.mxu0 0
  %1165 = vmatpush1.bf16.msra.mxu0 %v1149
  %1166 = vmatprep.subr.bf16.mxu0 0
  %1167 = vmatpush1.bf16.msra.mxu0 %v1148
  %1168 = vmatprep.subr.bf16.mxu0 0
  %1169 = vmatpush1.bf16.msra.mxu0 %v1147
  %1170 = vmatprep.subr.bf16.mxu0 0
  %1171 = vmatpush1.bf16.msra.mxu0 %v1146
  %1172 = vmatprep.subr.bf16.mxu0 0
  %1173 = vmatpush1.bf16.msra.mxu0 %v1145
  %1174 = vmatprep.subr.bf16.mxu0 0
  %1175 = vmatpush1.bf16.msra.mxu0 %v1144
  %1176 = vmatprep.subr.bf16.mxu0 0
  %1177 = vmatpush2.bf16.msra.mxu0 0
  %1178 = vmatprep.subr.bf16.mxu0 0
  %1179 = vmatpush2.bf16.msra.mxu0 0
  %1180 = vmatprep.subr.bf16.mxu0 0
  %1181 = vmatpush2.bf16.msra.mxu0 0
  %1182 = vmatprep.subr.bf16.mxu0 0
  %1183 = vmatpush2.bf16.msra.mxu0 0
  %1184 = vmatprep.subr.bf16.mxu0 0
  %1185 = vmatpush2.bf16.msra.mxu0 0
  %1186 = vmatprep.subr.bf16.mxu0 0
  %1187 = vmatpush2.bf16.msra.mxu0 0
  %1188 = vmatprep.subr.bf16.mxu0 0
  %1189 = vmatpush2.bf16.msra.mxu0 0
  %1190 = vmatprep.subr.bf16.mxu0 0
  %1191 = vmatpush2.bf16.msra.mxu0 0
  %1192 = vmatprep.mubr.bf16.mxu0 0
  %1193 = vmatmul.mubr.bf16.gmra.mxu0 %v1085
  %v1194 = vpop.f32.mrf.mxu0
  %v1195 = vadd.f32 %v1110, %v1194
  %v1196 = vpop.f32.mrf.mxu0
  %v1197 = vpop.f32.mrf.mxu0
  %v1198 = vadd.f32 %v1110, %v1197
  %v1199 = vpop.f32.mrf.mxu0
  %1200 = vmatprep.mubr.bf16.mxu0 0
  %1201 = vmatmul.mubr.bf16.gmra.mxu0 %v1086
  %v1202 = vpop.f32.mrf.mxu0
  %v1203 = vadd.f32 %v1110, %v1202
  %v1204 = vpop.f32.mrf.mxu0
  %v1205 = vpop.f32.mrf.mxu0
  %v1206 = vadd.f32 %v1110, %v1205
  %v1207 = vpop.f32.mrf.mxu0
  %1208 = vdwg.mxu0
  %v1209 = vmax.f32 %v1195, 0.0
  %v1210 = vmax.f32 %v1198, 0.0
  %v1211 = vmax.f32 %v1203, 0.0
  %v1212 = vmax.f32 %v1206, 0.0
  %v1213 = vld [vmem:[%s8] sm:$0x1]
  %v1215 = vlaneseq
  %v1216 = vshrl.u32 %v1215, 7
  %v1217 = vsub.s32 0, %v1216
  %v1218 = vrot.slane %v1213, %v1217
  %v1220 = vmul.f32 %v1209, %v1218
  %v1221 = vmul.f32 %v1210, %v1218
  %v1222 = vmul.f32 %v1211, %v1218
  %v1223 = vmul.f32 %v1212, %v1218
  %1224 = vadd.xlane.f32.xlu0 %v1220
  %v1225 = vpop.xlane.xlu0 %1224
  %1226 = vadd.xlane.f32.xlu0 %v1221
  %v1227 = vpop.xlane.xlu0 %1226
  %1228 = vadd.xlane.f32.xlu0 %v1222
  %v1229 = vpop.xlane.xlu0 %1228
  %1230 = vadd.xlane.f32.xlu0 %v1223
  %v1231 = vpop.xlane.xlu0 %1230
  %1232 = vst.msk [vmem:[%s10] sm:$0xff] %vm637, %v1225
  %1233 = vst.msk [vmem:[%s10 + $0x8] sm:$0xff] %vm637, %v1227
  %1234 = vst.msk [vmem:[%s10 + $0x10] sm:$0xff] %vm637, %v1229
  %1235 = vst.msk [vmem:[%s10 + $0x18] sm:$0xff] %vm637, %v1231
  // Predicated region
  $region38: #{subgnn_forward.2} parent=0 // pred_check
    _
  $region39: #{subgnn_forward.2} parent=0 // pred_check_branch
    %1237 = sbr.rel (0) target = $region41
  $region40: #{subgnn_forward.2} parent=0 // pred_region
    _
  $region41: #{subgnn_forward.2} parent=0 // pred_fallthru
    _
  // Predicated region
  $region42: #{subgnn_forward.2} parent=0 // pred_check
    _
  $region43: #{subgnn_forward.2} parent=0 // pred_check_branch
    %1239 = sbr.rel (0) target = $region45
  $region44: #{subgnn_forward.2} parent=0 // pred_region
    _
  $region45: #{subgnn_forward.2} parent=0 // pred_fallthru
    _
  // Predicated region
  $region46: #{subgnn_forward.2} parent=0 // pred_check
    _
  $region47: #{subgnn_forward.2} parent=0 // pred_check_branch
    %1241 = sbr.rel (0) target = $region49
  $region48: #{subgnn_forward.2} parent=0 // pred_region
    _
  $region49: #{subgnn_forward.2} parent=0 // pred_fallthru
    _
  // Predicated region
  $region50: #{subgnn_forward.2} parent=0 // pred_check
    _
  $region51: #{subgnn_forward.2} parent=0 // pred_check_branch
    %1243 = sbr.rel (0) target = $region53
  $region52: #{subgnn_forward.2} parent=0 // pred_region
    _
  $region53: #{subgnn_forward.2} parent=0 // pred_fallthru
    _

</llo_original>
